<compile_context>
chip_gen: v7x
topology: tpu7x:2x2x1
jax: 0.10.0
libtpu: 0.0.40
codegen_flags: <defaults>
</compile_context>

<pallas_src>
import functools

import jax
import jax.numpy as jnp
from jax import lax
from jax.experimental import pallas as pl
from jax.experimental.pallas import tpu as pltpu


# ----------------------------- Pallas kernel -------------------------------

def _bottleneck_kernel(x_ref, mask_ref, w1_ref, b1_ref, w2_ref, b2_ref,
                       w3_ref, b3_ref, o_ref, taps_ref, *,
                       W, dilation, compute_dtype):
    """One batch-chunk per grid step.

    x_ref:    (Cin, L) f32 with L = k * H * W (k images folded into lanes)
    mask_ref: (9, 1, L) f32 precomputed border-validity per 3x3 tap
    wX_ref:   BN-scale-folded weights, (Cout, K)-oriented, in compute_dtype
    bX_ref:   (C, 1) f32 BN-folded biases
    taps_ref: (9*planes, L) f32 VMEM scratch for the stacked conv2 GEMM
    """
    planes = w1_ref.shape[0]
    L = x_ref.shape[1]

    # ---- conv1 (1x1) + bn1 + relu : (planes, Cin) @ (Cin, L) ----
    a1 = jnp.dot(w1_ref[...], x_ref[...].astype(compute_dtype),
                 preferred_element_type=jnp.float32)
    a1 = jnp.maximum(a1 + b1_ref[...], 0.0)            # (planes, L) f32

    # ---- conv2 (3x3, stride=1, padding=dilation) ----
    # Build the 9 lane-rolled + border-masked taps once into a stacked
    # (9*planes, L) scratch, then contract with the (planes, 9*planes) weight
    # in a single MXU GEMM (one weight push / drain instead of 9, K=36).
    for t in range(9):
        dy, dx = divmod(t, 3)
        s = ((dy - 1) * W + (dx - 1)) * dilation
        if s == 0:
            shifted = a1
        else:
            shifted = pltpu.roll(a1, shift=(-s) % L, axis=1)
        taps_ref[pl.ds(t * planes, planes), :] = shifted * mask_ref[t]

    a2 = jnp.dot(w2_ref[...], taps_ref[...].astype(compute_dtype),
                 preferred_element_type=jnp.float32)
    a2 = jnp.maximum(a2 + b2_ref[...], 0.0)             # (planes, L) f32

    # ---- conv3 (1x1) + bn3 + identity residual + relu ----
    a3 = jnp.dot(w3_ref[...], a2.astype(compute_dtype),
                 preferred_element_type=jnp.float32)
    # Re-read x_ref here (rather than keeping the f32 input value live across
    # the whole body) to keep the residual's vreg live range short.
    o_ref[...] = jnp.maximum(a3 + b3_ref[...] + x_ref[...], 0.0)


# ------------------------------- wrapper ------------------------------------

def fold_bn(gamma, beta, mean, var, eps=1e-5):
    """BatchNorm (inference) -> per-channel scale/bias (1-D)."""
    scale = gamma / jnp.sqrt(var + eps)
    bias = beta - mean * scale
    return scale, bias


def _border_mask(H, W, dilation, k, dtype=jnp.float32):
    """(9, 1, k*H*W) validity table for the 3x3 taps (per-image, tiled k x)."""
    p = jnp.arange(H * W, dtype=jnp.int32)
    h = p // W
    w = p % W
    rows = []
    for dy in range(3):
        for dx in range(3):
            oy = (dy - 1) * dilation
            ox = (dx - 1) * dilation
            valid = ((h + oy >= 0) & (h + oy < H) &
                     (w + ox >= 0) & (w + ox < W))
            rows.append(valid)
    m = jnp.stack(rows).astype(dtype)                    # (9, H*W)
    return jnp.tile(m, (1, k))[:, None, :]               # (9, 1, k*H*W)


def _choose_grid(N, Cin, Cout, planes, HW, budget_bytes=24 * 1024 * 1024):
    """Pick (grid_steps, images_per_step): prefer >=2 steps (v7x has 2 TCs),
    then the fattest chunk that stays well under per-core VMEM (64 MiB on v7x).
    """
    def step_bytes(k):
        L = k * HW
        return (2 * Cin * L * 4 + 2 * Cout * L * 4       # double-buffered in/out
                + 9 * planes * L * 4 + 9 * L * 4         # taps scratch + mask
                + 6 * planes * L * 4)                    # live intermediates (rough)
    for g in range(1, N + 1):
        if N % g:
            continue
        k = N // g
        if (g >= 2 or N == 1) and step_bytes(k) <= budget_bytes:
            return g, k
    return N, 1


def bottleneck_forward(x_nchw, params, dilation=1, compute_dtype=jnp.bfloat16):
    """Fused Pallas Bottleneck forward.  x_nchw: (N, C, H, W) f32 -> same shape."""
    N, Cin, H, W = x_nchw.shape
    HW = H * W
    planes = params["w1"].shape[1]
    Cout = params["w3"].shape[1]
    assert Cout == Cin, "identity shortcut requires inplanes == planes*expansion"

    s1, b1 = fold_bn(*params["bn1"])
    s2, b2 = fold_bn(*params["bn2"])
    s3, b3 = fold_bn(*params["bn3"])

    # BN-scale-folded, (Cout, K)-oriented weights in the MXU operand dtype.
    w1e = (params["w1"].T * s1[:, None]).astype(compute_dtype)      # (planes, Cin)
    w2t = jnp.transpose(params["w2"], (0, 1, 3, 2)).reshape(9, planes, planes)
    w2t = w2t * s2[None, :, None]                                   # (tap, co, ci)
    w2e = jnp.transpose(w2t, (1, 0, 2)).reshape(
        planes, 9 * planes).astype(compute_dtype)                   # (planes, 9*planes)
    w3e = (params["w3"].T * s3[:, None]).astype(compute_dtype)      # (Cout, planes)

    G, k = _choose_grid(N, Cin, Cout, planes, HW)
    L = k * HW

    # Channel-major with batch folded into the lane axis: (Cin, N*HW).
    x_cm = jnp.transpose(x_nchw.reshape(N, Cin, HW), (1, 0, 2)).reshape(Cin, N * HW)
    mask = _border_mask(H, W, dilation, k, jnp.float32)             # (9, 1, L)

    flops = 2 * N * HW * (Cin * planes + 9 * planes * planes + planes * Cout)
    param_bytes = ((w1e.size + w2e.size + w3e.size)
                   * jnp.dtype(compute_dtype).itemsize
                   + (b1.size + b2.size + b3.size + mask.size) * 4)
    bytes_accessed = int(x_cm.size * 4 + Cout * N * HW * 4 + param_bytes)

    kernel = functools.partial(_bottleneck_kernel, W=W, dilation=dilation,
                               compute_dtype=compute_dtype)
    out_cm = pl.pallas_call(
        kernel,
        out_shape=jax.ShapeDtypeStruct((Cout, N * HW), jnp.float32),
        grid_spec=pltpu.PrefetchScalarGridSpec(
            num_scalar_prefetch=0,
            grid=(G,),
            in_specs=[
                pl.BlockSpec((Cin, L), lambda g: (0, g)),
                # Mask / weights / biases: constant index_map -> DMA'd once,
                # VMEM-resident across the grid.
                pl.BlockSpec((9, 1, L), lambda g: (0, 0, 0)),
                pl.BlockSpec((planes, Cin), lambda g: (0, 0)),
                pl.BlockSpec((planes, 1), lambda g: (0, 0)),
                pl.BlockSpec((planes, 9 * planes), lambda g: (0, 0)),
                pl.BlockSpec((planes, 1), lambda g: (0, 0)),
                pl.BlockSpec((Cout, planes), lambda g: (0, 0)),
                pl.BlockSpec((Cout, 1), lambda g: (0, 0)),
            ],
            out_specs=pl.BlockSpec((Cout, L), lambda g: (0, g)),
            scratch_shapes=[pltpu.VMEM((9 * planes, L), jnp.float32)],
        ),
        compiler_params=pltpu.CompilerParams(
            dimension_semantics=("parallel",),      # >=2 steps -> both v7x TCs busy
            vmem_limit_bytes=32 * 1024 * 1024,
        ),
        cost_estimate=pl.CostEstimate(flops=flops, transcendentals=0,
                                      bytes_accessed=bytes_accessed),
    )(x_cm, mask, w1e, b1[:, None], w2e, b2[:, None], w3e, b3[:, None])

    return jnp.transpose(out_cm.reshape(Cout, N, HW),
                         (1, 0, 2)).reshape(N, Cout, H, W)


# -------------------------- pure-JAX reference ------------------------------

def _ref_conv(x_nhwc, w_hwio, stride=1, dilation=1, padding="VALID"):
    return lax.conv_general_dilated(
        x_nhwc, w_hwio, window_strides=(stride, stride), padding=padding,
        rhs_dilation=(dilation, dilation),
        dimension_numbers=("NHWC", "HWIO", "NHWC"))


def bottleneck_reference(x_nchw, params, dilation=1):
    x = jnp.transpose(x_nchw, (0, 2, 3, 1))
    planes = params["w1"].shape[1]

    def bn(y, p):
        s, b = fold_bn(*p)
        return y * s + b

    out = _ref_conv(x, params["w1"].reshape(1, 1, -1, planes))
    out = jnp.maximum(bn(out, params["bn1"]), 0.0)
    pad = dilation
    out = _ref_conv(out, params["w2"], dilation=dilation,
                    padding=[(pad, pad), (pad, pad)])
    out = jnp.maximum(bn(out, params["bn2"]), 0.0)
    out = _ref_conv(out, params["w3"].reshape(1, 1, planes, -1))
    out = bn(out, params["bn3"]) + x
    out = jnp.maximum(out, 0.0)
    return jnp.transpose(out, (0, 3, 1, 2))


# ----------------------------------- main -----------------------------------

if __name__ == "__main__":
    key = jax.random.PRNGKey(0)
    Nb, planes = 4, 4
    expansion = 4
    inplanes = planes * expansion        # 16, so the identity shortcut is valid
    H = W = 16

    ks = jax.random.split(key, 8)
    x = jax.random.normal(ks[0], (Nb, inplanes, H, W), jnp.float32)

    def bn_params(k, c):
        k1, k2, k3, k4 = jax.random.split(k, 4)
        gamma = 1.0 + 0.1 * jax.random.normal(k1, (c,), jnp.float32)
        beta = 0.1 * jax.random.normal(k2, (c,), jnp.float32)
        mean = 0.1 * jax.random.normal(k3, (c,), jnp.float32)
        var = jnp.abs(jax.random.normal(k4, (c,), jnp.float32)) + 0.5
        return (gamma, beta, mean, var)

    params = {
        # conv1: 1x1, stored (Cin, planes)
        "w1": 0.1 * jax.random.normal(ks[1], (inplanes, planes), jnp.float32),
        "bn1": bn_params(ks[2], planes),
        # conv2: 3x3 HWIO, (3, 3, planes, planes)
        "w2": 0.1 * jax.random.normal(ks[3], (3, 3, planes, planes), jnp.float32),
        "bn2": bn_params(ks[4], planes),
        # conv3: 1x1, stored (planes, planes*expansion)
        "w3": 0.1 * jax.random.normal(ks[5], (planes, planes * expansion), jnp.float32),
        "bn3": bn_params(ks[6], planes * expansion),
    }

    fwd_f32 = jax.jit(functools.partial(bottleneck_forward, dilation=1,
                                        compute_dtype=jnp.float32))
    fwd_bf16 = jax.jit(functools.partial(bottleneck_forward, dilation=1,
                                         compute_dtype=jnp.bfloat16))

    out_f32 = jax.block_until_ready(fwd_f32(x, params))
    out_bf16 = jax.block_until_ready(fwd_bf16(x, params))

    ref = bottleneck_reference(x, params, dilation=1)
    assert out_f32.shape == (Nb, inplanes, H, W)
    # f32 compute path: tight structural check.
    assert jnp.allclose(out_f32, ref, atol=1e-4, rtol=1e-4), "f32 mismatch vs reference"
    # bf16 MXU-operand path (f32 accumulate/epilogue): bf16-aware tolerance.
    assert jnp.allclose(out_bf16, ref, atol=5e-2, rtol=5e-2), "bf16 mismatch vs reference"

    print("KERNEL_OK")
</pallas_src>

<mosaic_0001>
module attributes {stable_mosaic.version = 11 : i64} {
  func.func @_bottleneck_kernel(%arg0: i32, %arg1: memref<16x512xf32, #tpu.memory_space<vmem>>, %arg2: memref<9x1x512xf32, #tpu.memory_space<vmem>>, %arg3: memref<4x16xf32, #tpu.memory_space<vmem>>, %arg4: memref<4x1xf32, #tpu.memory_space<vmem>>, %arg5: memref<4x36xf32, #tpu.memory_space<vmem>>, %arg6: memref<4x1xf32, #tpu.memory_space<vmem>>, %arg7: memref<16x4xf32, #tpu.memory_space<vmem>>, %arg8: memref<16x1xf32, #tpu.memory_space<vmem>>, %arg9: memref<16x512xf32, #tpu.memory_space<vmem>>, %arg10: memref<36x512xf32, #tpu.memory_space<vmem>>) attributes {dimension_semantics = [#tpu.dimension_semantics<parallel>], iteration_bounds = array<i64: 2>, scalar_prefetch = 0 : i64, scratch_operands = 1 : i64, tpu.core_type = #tpu.core_type<tc>, window_params = [{transform_indices = @transform_0, window_bounds = array<i64: 16, 512>}, {pipeline_mode = #tpu.pipeline_mode<synchronous>, transform_indices = @transform_1, window_bounds = array<i64: 9, 1, 512>}, {pipeline_mode = #tpu.pipeline_mode<synchronous>, transform_indices = @transform_2, window_bounds = array<i64: 4, 16>}, {pipeline_mode = #tpu.pipeline_mode<synchronous>, transform_indices = @transform_3, window_bounds = array<i64: 4, 1>}, {pipeline_mode = #tpu.pipeline_mode<synchronous>, transform_indices = @transform_4, window_bounds = array<i64: 4, 36>}, {pipeline_mode = #tpu.pipeline_mode<synchronous>, transform_indices = @transform_5, window_bounds = array<i64: 4, 1>}, {pipeline_mode = #tpu.pipeline_mode<synchronous>, transform_indices = @transform_6, window_bounds = array<i64: 16, 4>}, {pipeline_mode = #tpu.pipeline_mode<synchronous>, transform_indices = @transform_7, window_bounds = array<i64: 16, 1>}, {transform_indices = @transform_8, window_bounds = array<i64: 16, 512>}]} {
    %c0 = arith.constant 0 : index
    %c0_0 = arith.constant 0 : index
    %0 = vector.load %arg3[%c0, %c0_0] : memref<4x16xf32, #tpu.memory_space<vmem>>, vector<4x16xf32>
    %c0_1 = arith.constant 0 : index
    %c0_2 = arith.constant 0 : index
    %1 = vector.load %arg1[%c0_1, %c0_2] : memref<16x512xf32, #tpu.memory_space<vmem>>, vector<16x512xf32>
    %cst = arith.constant dense<0.000000e+00> : vector<4x512xf32>
    %2 = tpu.matmul %0, %1, %cst {dimension_numbers = #tpu.dot_dimension_numbers<[1], [0], [0], [1], [0, 0, 1, 1], [], []>} : vector<4x16xf32>, vector<16x512xf32>, vector<4x512xf32> -> vector<4x512xf32>
    %c0_3 = arith.constant 0 : index
    %c0_4 = arith.constant 0 : index
    %3 = vector.load %arg4[%c0_3, %c0_4] : memref<4x1xf32, #tpu.memory_space<vmem>>, vector<4x1xf32>
    %4 = vector.broadcast %3 : vector<4x1xf32> to vector<4x512xf32>
    %5 = arith.addf %2, %4 : vector<4x512xf32>
    %cst_5 = arith.constant 0.000000e+00 : f32
    %6 = vector.broadcast %cst_5 : f32 to vector<4x512xf32>
    %7 = arith.maximumf %5, %6 : vector<4x512xf32>
    %c17_i32 = arith.constant 17 : i32
    %8 = tpu.dynamic_rotate %7 by %c17_i32 dim 1 : vector<4x512xf32>, i32 -> vector<4x512xf32>
    %c0_6 = arith.constant 0 : index
    %c0_7 = arith.constant 0 : index
    %c0_8 = arith.constant 0 : index
    %9 = vector.load %arg2[%c0_6, %c0_7, %c0_8] : memref<9x1x512xf32, #tpu.memory_space<vmem>>, vector<1x1x512xf32>
    %10 = vector.shape_cast %9 : vector<1x1x512xf32> to vector<1x512xf32>
    %11 = vector.broadcast %10 : vector<1x512xf32> to vector<4x512xf32>
    %12 = arith.mulf %8, %11 : vector<4x512xf32>
    %c0_9 = arith.constant 0 : index
    %c0_10 = arith.constant 0 : index
    %13 = vector.load %arg10[%c0_9, %c0_10] : memref<36x512xf32, #tpu.memory_space<vmem>>, vector<4x512xf32>
    tpu.vector_store %arg10[%c0_9, %c0_10], %12 {strides = array<i32>} : memref<36x512xf32, #tpu.memory_space<vmem>>, vector<4x512xf32>,
    %c16_i32 = arith.constant 16 : i32
    %14 = tpu.dynamic_rotate %7 by %c16_i32 dim 1 : vector<4x512xf32>, i32 -> vector<4x512xf32>
    %c1 = arith.constant 1 : index
    %c0_11 = arith.constant 0 : index
    %c0_12 = arith.constant 0 : index
    %15 = vector.load %arg2[%c1, %c0_11, %c0_12] : memref<9x1x512xf32, #tpu.memory_space<vmem>>, vector<1x1x512xf32>
    %16 = vector.shape_cast %15 : vector<1x1x512xf32> to vector<1x512xf32>
    %17 = vector.broadcast %16 : vector<1x512xf32> to vector<4x512xf32>
    %18 = arith.mulf %14, %17 : vector<4x512xf32>
    %c4 = arith.constant 4 : index
    %c0_13 = arith.constant 0 : index
    %19 = vector.load %arg10[%c4, %c0_13] : memref<36x512xf32, #tpu.memory_space<vmem>>, vector<4x512xf32>
    tpu.vector_store %arg10[%c4, %c0_13], %18 {strides = array<i32>} : memref<36x512xf32, #tpu.memory_space<vmem>>, vector<4x512xf32>,
    %c15_i32 = arith.constant 15 : i32
    %20 = tpu.dynamic_rotate %7 by %c15_i32 dim 1 : vector<4x512xf32>, i32 -> vector<4x512xf32>
    %c2 = arith.constant 2 : index
    %c0_14 = arith.constant 0 : index
    %c0_15 = arith.constant 0 : index
    %21 = vector.load %arg2[%c2, %c0_14, %c0_15] : memref<9x1x512xf32, #tpu.memory_space<vmem>>, vector<1x1x512xf32>
    %22 = vector.shape_cast %21 : vector<1x1x512xf32> to vector<1x512xf32>
    %23 = vector.broadcast %22 : vector<1x512xf32> to vector<4x512xf32>
    %24 = arith.mulf %20, %23 : vector<4x512xf32>
    %c8 = arith.constant 8 : index
    %c0_16 = arith.constant 0 : index
    %25 = vector.load %arg10[%c8, %c0_16] : memref<36x512xf32, #tpu.memory_space<vmem>>, vector<4x512xf32>
    tpu.vector_store %arg10[%c8, %c0_16], %24 {strides = array<i32>} : memref<36x512xf32, #tpu.memory_space<vmem>>, vector<4x512xf32>,
    %c1_i32 = arith.constant 1 : i32
    %26 = tpu.dynamic_rotate %7 by %c1_i32 dim 1 : vector<4x512xf32>, i32 -> vector<4x512xf32>
    %c3 = arith.constant 3 : index
    %c0_17 = arith.constant 0 : index
    %c0_18 = arith.constant 0 : index
    %27 = vector.load %arg2[%c3, %c0_17, %c0_18] : memref<9x1x512xf32, #tpu.memory_space<vmem>>, vector<1x1x512xf32>
    %28 = vector.shape_cast %27 : vector<1x1x512xf32> to vector<1x512xf32>
    %29 = vector.broadcast %28 : vector<1x512xf32> to vector<4x512xf32>
    %30 = arith.mulf %26, %29 : vector<4x512xf32>
    %c12 = arith.constant 12 : index
    %c0_19 = arith.constant 0 : index
    %31 = vector.load %arg10[%c12, %c0_19] : memref<36x512xf32, #tpu.memory_space<vmem>>, vector<4x512xf32>
    tpu.vector_store %arg10[%c12, %c0_19], %30 {strides = array<i32>} : memref<36x512xf32, #tpu.memory_space<vmem>>, vector<4x512xf32>,
    %c4_20 = arith.constant 4 : index
    %c0_21 = arith.constant 0 : index
    %c0_22 = arith.constant 0 : index
    %32 = vector.load %arg2[%c4_20, %c0_21, %c0_22] : memref<9x1x512xf32, #tpu.memory_space<vmem>>, vector<1x1x512xf32>
    %33 = vector.shape_cast %32 : vector<1x1x512xf32> to vector<1x512xf32>
    %34 = vector.broadcast %33 : vector<1x512xf32> to vector<4x512xf32>
    %35 = arith.mulf %7, %34 : vector<4x512xf32>
    %c16 = arith.constant 16 : index
    %c0_23 = arith.constant 0 : index
    %36 = vector.load %arg10[%c16, %c0_23] : memref<36x512xf32, #tpu.memory_space<vmem>>, vector<4x512xf32>
    tpu.vector_store %arg10[%c16, %c0_23], %35 {strides = array<i32>} : memref<36x512xf32, #tpu.memory_space<vmem>>, vector<4x512xf32>,
    %c511_i32 = arith.constant 511 : i32
    %37 = tpu.dynamic_rotate %7 by %c511_i32 dim 1 : vector<4x512xf32>, i32 -> vector<4x512xf32>
    %c5 = arith.constant 5 : index
    %c0_24 = arith.constant 0 : index
    %c0_25 = arith.constant 0 : index
    %38 = vector.load %arg2[%c5, %c0_24, %c0_25] : memref<9x1x512xf32, #tpu.memory_space<vmem>>, vector<1x1x512xf32>
    %39 = vector.shape_cast %38 : vector<1x1x512xf32> to vector<1x512xf32>
    %40 = vector.broadcast %39 : vector<1x512xf32> to vector<4x512xf32>
    %41 = arith.mulf %37, %40 : vector<4x512xf32>
    %c20 = arith.constant 20 : index
    %c0_26 = arith.constant 0 : index
    %42 = vector.load %arg10[%c20, %c0_26] : memref<36x512xf32, #tpu.memory_space<vmem>>, vector<4x512xf32>
    tpu.vector_store %arg10[%c20, %c0_26], %41 {strides = array<i32>} : memref<36x512xf32, #tpu.memory_space<vmem>>, vector<4x512xf32>,
    %c497_i32 = arith.constant 497 : i32
    %43 = tpu.dynamic_rotate %7 by %c497_i32 dim 1 : vector<4x512xf32>, i32 -> vector<4x512xf32>
    %c6 = arith.constant 6 : index
    %c0_27 = arith.constant 0 : index
    %c0_28 = arith.constant 0 : index
    %44 = vector.load %arg2[%c6, %c0_27, %c0_28] : memref<9x1x512xf32, #tpu.memory_space<vmem>>, vector<1x1x512xf32>
    %45 = vector.shape_cast %44 : vector<1x1x512xf32> to vector<1x512xf32>
    %46 = vector.broadcast %45 : vector<1x512xf32> to vector<4x512xf32>
    %47 = arith.mulf %43, %46 : vector<4x512xf32>
    %c24 = arith.constant 24 : index
    %c0_29 = arith.constant 0 : index
    %48 = vector.load %arg10[%c24, %c0_29] : memref<36x512xf32, #tpu.memory_space<vmem>>, vector<4x512xf32>
    tpu.vector_store %arg10[%c24, %c0_29], %47 {strides = array<i32>} : memref<36x512xf32, #tpu.memory_space<vmem>>, vector<4x512xf32>,
    %c496_i32 = arith.constant 496 : i32
    %49 = tpu.dynamic_rotate %7 by %c496_i32 dim 1 : vector<4x512xf32>, i32 -> vector<4x512xf32>
    %c7 = arith.constant 7 : index
    %c0_30 = arith.constant 0 : index
    %c0_31 = arith.constant 0 : index
    %50 = vector.load %arg2[%c7, %c0_30, %c0_31] : memref<9x1x512xf32, #tpu.memory_space<vmem>>, vector<1x1x512xf32>
    %51 = vector.shape_cast %50 : vector<1x1x512xf32> to vector<1x512xf32>
    %52 = vector.broadcast %51 : vector<1x512xf32> to vector<4x512xf32>
    %53 = arith.mulf %49, %52 : vector<4x512xf32>
    %c28 = arith.constant 28 : index
    %c0_32 = arith.constant 0 : index
    %54 = vector.load %arg10[%c28, %c0_32] : memref<36x512xf32, #tpu.memory_space<vmem>>, vector<4x512xf32>
    tpu.vector_store %arg10[%c28, %c0_32], %53 {strides = array<i32>} : memref<36x512xf32, #tpu.memory_space<vmem>>, vector<4x512xf32>,
    %c495_i32 = arith.constant 495 : i32
    %55 = tpu.dynamic_rotate %7 by %c495_i32 dim 1 : vector<4x512xf32>, i32 -> vector<4x512xf32>
    %c8_33 = arith.constant 8 : index
    %c0_34 = arith.constant 0 : index
    %c0_35 = arith.constant 0 : index
    %56 = vector.load %arg2[%c8_33, %c0_34, %c0_35] : memref<9x1x512xf32, #tpu.memory_space<vmem>>, vector<1x1x512xf32>
    %57 = vector.shape_cast %56 : vector<1x1x512xf32> to vector<1x512xf32>
    %58 = vector.broadcast %57 : vector<1x512xf32> to vector<4x512xf32>
    %59 = arith.mulf %55, %58 : vector<4x512xf32>
    %c32 = arith.constant 32 : index
    %c0_36 = arith.constant 0 : index
    %60 = vector.load %arg10[%c32, %c0_36] : memref<36x512xf32, #tpu.memory_space<vmem>>, vector<4x512xf32>
    tpu.vector_store %arg10[%c32, %c0_36], %59 {strides = array<i32>} : memref<36x512xf32, #tpu.memory_space<vmem>>, vector<4x512xf32>,
    %c0_37 = arith.constant 0 : index
    %c0_38 = arith.constant 0 : index
    %61 = vector.load %arg5[%c0_37, %c0_38] : memref<4x36xf32, #tpu.memory_space<vmem>>, vector<4x36xf32>
    %c0_39 = arith.constant 0 : index
    %c0_40 = arith.constant 0 : index
    %62 = vector.load %arg10[%c0_39, %c0_40] : memref<36x512xf32, #tpu.memory_space<vmem>>, vector<36x512xf32>
    %cst_41 = arith.constant dense<0.000000e+00> : vector<4x512xf32>
    %63 = tpu.matmul %61, %62, %cst_41 {dimension_numbers = #tpu.dot_dimension_numbers<[1], [0], [0], [1], [0, 0, 1, 1], [], []>} : vector<4x36xf32>, vector<36x512xf32>, vector<4x512xf32> -> vector<4x512xf32>
    %c0_42 = arith.constant 0 : index
    %c0_43 = arith.constant 0 : index
    %64 = vector.load %arg6[%c0_42, %c0_43] : memref<4x1xf32, #tpu.memory_space<vmem>>, vector<4x1xf32>
    %65 = vector.broadcast %64 : vector<4x1xf32> to vector<4x512xf32>
    %66 = arith.addf %63, %65 : vector<4x512xf32>
    %cst_44 = arith.constant 0.000000e+00 : f32
    %67 = vector.broadcast %cst_44 : f32 to vector<4x512xf32>
    %68 = arith.maximumf %66, %67 : vector<4x512xf32>
    %c0_45 = arith.constant 0 : index
    %c0_46 = arith.constant 0 : index
    %69 = vector.load %arg7[%c0_45, %c0_46] : memref<16x4xf32, #tpu.memory_space<vmem>>, vector<16x4xf32>
    %cst_47 = arith.constant dense<0.000000e+00> : vector<16x512xf32>
    %70 = tpu.matmul %69, %68, %cst_47 {dimension_numbers = #tpu.dot_dimension_numbers<[1], [0], [0], [1], [0, 0, 1, 1], [], []>} : vector<16x4xf32>, vector<4x512xf32>, vector<16x512xf32> -> vector<16x512xf32>
    %c0_48 = arith.constant 0 : index
    %c0_49 = arith.constant 0 : index
    %71 = vector.load %arg8[%c0_48, %c0_49] : memref<16x1xf32, #tpu.memory_space<vmem>>, vector<16x1xf32>
    %72 = vector.broadcast %71 : vector<16x1xf32> to vector<16x512xf32>
    %73 = arith.addf %70, %72 : vector<16x512xf32>
    %c0_50 = arith.constant 0 : index
    %c0_51 = arith.constant 0 : index
    %74 = vector.load %arg1[%c0_50, %c0_51] : memref<16x512xf32, #tpu.memory_space<vmem>>, vector<16x512xf32>
    %75 = arith.addf %73, %74 : vector<16x512xf32>
    %cst_52 = arith.constant 0.000000e+00 : f32
    %76 = vector.broadcast %cst_52 : f32 to vector<16x512xf32>
    %77 = arith.maximumf %75, %76 : vector<16x512xf32>
    %c0_53 = arith.constant 0 : index
    %c0_54 = arith.constant 0 : index
    %78 = vector.load %arg9[%c0_53, %c0_54] : memref<16x512xf32, #tpu.memory_space<vmem>>, vector<16x512xf32>
    tpu.vector_store %arg9[%c0_53, %c0_54], %77 {strides = array<i32>} : memref<16x512xf32, #tpu.memory_space<vmem>>, vector<16x512xf32>,
    return
  }
  func.func @transform_0(%arg0: i32) -> (i32, i32) {
    %c0_i32 = arith.constant 0 : i32
    %c0_i32_0 = arith.constant 0 : i32
    return %c0_i32, %arg0 : i32, i32
  }
  func.func @transform_1(%arg0: i32) -> (i32, i32, i32) {
    %c0_i32 = arith.constant 0 : i32
    %c0_i32_0 = arith.constant 0 : i32
    %c0_i32_1 = arith.constant 0 : i32
    %c0_i32_2 = arith.constant 0 : i32
    return %c0_i32, %c0_i32_0, %c0_i32_1 : i32, i32, i32
  }
  func.func @transform_2(%arg0: i32) -> (i32, i32) {
    %c0_i32 = arith.constant 0 : i32
    %c0_i32_0 = arith.constant 0 : i32
    %c0_i32_1 = arith.constant 0 : i32
    return %c0_i32, %c0_i32_0 : i32, i32
  }
  func.func @transform_3(%arg0: i32) -> (i32, i32) {
    %c0_i32 = arith.constant 0 : i32
    %c0_i32_0 = arith.constant 0 : i32
    %c0_i32_1 = arith.constant 0 : i32
    return %c0_i32, %c0_i32_0 : i32, i32
  }
  func.func @transform_4(%arg0: i32) -> (i32, i32) {
    %c0_i32 = arith.constant 0 : i32
    %c0_i32_0 = arith.constant 0 : i32
    %c0_i32_1 = arith.constant 0 : i32
    return %c0_i32, %c0_i32_0 : i32, i32
  }
  func.func @transform_5(%arg0: i32) -> (i32, i32) {
    %c0_i32 = arith.constant 0 : i32
    %c0_i32_0 = arith.constant 0 : i32
    %c0_i32_1 = arith.constant 0 : i32
    return %c0_i32, %c0_i32_0 : i32, i32
  }
  func.func @transform_6(%arg0: i32) -> (i32, i32) {
    %c0_i32 = arith.constant 0 : i32
    %c0_i32_0 = arith.constant 0 : i32
    %c0_i32_1 = arith.constant 0 : i32
    return %c0_i32, %c0_i32_0 : i32, i32
  }
  func.func @transform_7(%arg0: i32) -> (i32, i32) {
    %c0_i32 = arith.constant 0 : i32
    %c0_i32_0 = arith.constant 0 : i32
    %c0_i32_1 = arith.constant 0 : i32
    return %c0_i32, %c0_i32_0 : i32, i32
  }
  func.func @transform_8(%arg0: i32) -> (i32, i32) {
    %c0_i32 = arith.constant 0 : i32
    %c0_i32_0 = arith.constant 0 : i32
    return %c0_i32, %arg0 : i32, i32
  }
}

</mosaic_0001>

<llo_original>
// kernel: bottleneck_forward.1
$region0: #{bottleneck_forward.1}
  #allocation0 [shape = 'u32[]', space=smem, size = 0x4, offset = 0x4, fixed_abs, tag = 'smem constant byte address 0x4 - core index']
  #allocation1 [shape = 'u32[144,128]{1,0:T(1,128)}', space=vmem, size = 0x12000, scoped, tag = 'internal scratch']
  #allocation2 [shape = 'f32[36,512]{1,0:T(8,128)}', space=vmem, size = 0x14000, scoped, tag = 'scratch operand']
  %s0 = inlined_call_operand.vmem [shape: f32[16,1024], index: 0, kind: input, shape index: {}]
  %s1 = inlined_call_operand.vmem [shape: f32[9,1,512], index: 1, kind: input, shape index: {}]
  %s2 = inlined_call_operand.vmem [shape: f32[4,16], index: 2, kind: input, shape index: {}]
  %s3 = inlined_call_operand.vmem [shape: f32[4,1], index: 3, kind: input, shape index: {}]
  %s4 = inlined_call_operand.vmem [shape: f32[4,36], index: 4, kind: input, shape index: {}]
  %s5 = inlined_call_operand.vmem [shape: f32[4,1], index: 5, kind: input, shape index: {}]
  %s6 = inlined_call_operand.vmem [shape: f32[16,4], index: 6, kind: input, shape index: {}]
  %s7 = inlined_call_operand.vmem [shape: f32[16,1], index: 7, kind: input, shape index: {}]
  %s8 = inlined_call_operand.vmem [shape: f32[16,1024], index: 8, kind: output, shape index: {}]
  %s9 = sld [smem:[#allocation0]]
  $region107: #{bottleneck_forward.1} parent=0
    _
  %s11 = ssub.s32 1, %s9
  %s12 = scalar_select 0, %s11, %s9
  $region1: #{bottleneck_forward.1} parent=0
    #allocation3 [shape = 'u8[65536]{0}', space=vmem, size = 0x10000, scoped, tag = 'input window, operand 0']
    #allocation4 [shape = 'u8[65536]{0}', space=vmem, size = 0x10000, scoped, tag = 'output window, operand 0']
    loop: start=0, step=1, limit=4
    $region2: #{bottleneck_forward.1} parent=1 // loop_pre_header
      _
    $region3: #{bottleneck_forward.1} parent=1 // loop_header
      %s14 = sphi 0, %s18
      %p15 = scmp.ge.s32.totalorder %s14, 4
      %s24 = sphi 0, %s26
      %s27 = sphi 0, %s24
      %s28 = sphi 0, %s27
      %s44 = sphi 0, %s28
      %s48 = sphi 0, %s48
      %s50 = sphi 0, %s48
      %s51 = sphi 0, %s50
      %s65 = sphi 0, %s51
      %s69 = sphi 0, %s69
      %s71 = sphi 0, %s69
      %s72 = sphi 0, %s71
      %s86 = sphi 0, %s72
      %s90 = sphi 0, %s90
      %s92 = sphi 0, %s90
      %s93 = sphi 0, %s92
      %s107 = sphi 0, %s93
      %s111 = sphi 0, %s111
      %s113 = sphi 0, %s111
      %s114 = sphi 0, %s113
      %s128 = sphi 0, %s114
      %s132 = sphi 0, %s132
      %s134 = sphi 0, %s132
      %s135 = sphi 0, %s134
      %s149 = sphi 0, %s135
      %s153 = sphi 0, %s153
      %s155 = sphi 0, %s153
      %s156 = sphi 0, %s155
      %s170 = sphi 0, %s156
      %s174 = sphi 0, %s174
      %s176 = sphi 0, %s174
      %s177 = sphi 0, %s176
      %s191 = sphi 0, %s177
      %s197 = sphi 0, %s199
      %s200 = sphi 0, %s197
      %s201 = sphi 0, %s200
      %s217 = sphi 0, %s201
    $region4: #{bottleneck_forward.1} parent=1 // loop_header_branch
      %17 = sbr.rel (%p15) target = $region8
    $region5: #{bottleneck_forward.1} parent=1 // loop_body
      %s19 = ssub.s32 %s14, 1
      %s20 = ssub.s32 %s14, 2
      %s21 = sadd.s32 %s14, 1
      %s22 = ssub.s32 %s14, %s21
      %p23 = scmp.eq.s32.totalorder %s22, 0
      %s25 = sadd.s32 %s24, 1
      %s26 = scalar_select %p23, %s24, %s25
      %p29 = pneg %p23
      %p30 = scmp.eq.s32.totalorder %s14, 1
      %p31 = por %p29, %p30
      %p32 = scmp.ne.s32.totalorder %s24, %s27
      %p33 = scmp.eq.s32.totalorder %s14, 0
      %p34 = por %p32, %p33
      %p35 = scmp.ne.s32.totalorder %s24, %s27
      %p36 = scmp.eq.s32.totalorder %s19, 1
      %p37 = por %p35, %p36
      %p38 = scmp.ne.s32.totalorder %s27, %s28
      %p39 = scmp.eq.s32.totalorder %s19, 0
      %p40 = por %p38, %p39
      %p41 = scmp.ne.s32.totalorder %s27, %s28
      %p42 = scmp.eq.s32.totalorder %s20, 1
      %p43 = por %p41, %p42
      %p45 = scmp.ne.s32.totalorder %s28, %s44
      %p46 = scmp.eq.s32.totalorder %s20, 0
      %p47 = por %p45, %p46
      %s49 = sadd.s32 %s48, 1
      %p52 = scmp.eq.s32.totalorder %s14, 1
      %p53 = scmp.ne.s32.totalorder %s48, %s50
      %p54 = scmp.eq.s32.totalorder %s14, 0
      %p55 = por %p53, %p54
      %p56 = scmp.ne.s32.totalorder %s48, %s50
      %p57 = scmp.eq.s32.totalorder %s19, 1
      %p58 = por %p56, %p57
      %p59 = scmp.ne.s32.totalorder %s50, %s51
      %p60 = scmp.eq.s32.totalorder %s19, 0
      %p61 = por %p59, %p60
      %p62 = scmp.ne.s32.totalorder %s50, %s51
      %p63 = scmp.eq.s32.totalorder %s20, 1
      %p64 = por %p62, %p63
      %p66 = scmp.ne.s32.totalorder %s51, %s65
      %p67 = scmp.eq.s32.totalorder %s20, 0
      %p68 = por %p66, %p67
      %s70 = sadd.s32 %s69, 1
      %p73 = scmp.eq.s32.totalorder %s14, 1
      %p74 = scmp.ne.s32.totalorder %s69, %s71
      %p75 = scmp.eq.s32.totalorder %s14, 0
      %p76 = por %p74, %p75
      %p77 = scmp.ne.s32.totalorder %s69, %s71
      %p78 = scmp.eq.s32.totalorder %s19, 1
      %p79 = por %p77, %p78
      %p80 = scmp.ne.s32.totalorder %s71, %s72
      %p81 = scmp.eq.s32.totalorder %s19, 0
      %p82 = por %p80, %p81
      %p83 = scmp.ne.s32.totalorder %s71, %s72
      %p84 = scmp.eq.s32.totalorder %s20, 1
      %p85 = por %p83, %p84
      %p87 = scmp.ne.s32.totalorder %s72, %s86
      %p88 = scmp.eq.s32.totalorder %s20, 0
      %p89 = por %p87, %p88
      %s91 = sadd.s32 %s90, 1
      %p94 = scmp.eq.s32.totalorder %s14, 1
      %p95 = scmp.ne.s32.totalorder %s90, %s92
      %p96 = scmp.eq.s32.totalorder %s14, 0
      %p97 = por %p95, %p96
      %p98 = scmp.ne.s32.totalorder %s90, %s92
      %p99 = scmp.eq.s32.totalorder %s19, 1
      %p100 = por %p98, %p99
      %p101 = scmp.ne.s32.totalorder %s92, %s93
      %p102 = scmp.eq.s32.totalorder %s19, 0
      %p103 = por %p101, %p102
      %p104 = scmp.ne.s32.totalorder %s92, %s93
      %p105 = scmp.eq.s32.totalorder %s20, 1
      %p106 = por %p104, %p105
      %p108 = scmp.ne.s32.totalorder %s93, %s107
      %p109 = scmp.eq.s32.totalorder %s20, 0
      %p110 = por %p108, %p109
      %s112 = sadd.s32 %s111, 1
      %p115 = scmp.eq.s32.totalorder %s14, 1
      %p116 = scmp.ne.s32.totalorder %s111, %s113
      %p117 = scmp.eq.s32.totalorder %s14, 0
      %p118 = por %p116, %p117
      %p119 = scmp.ne.s32.totalorder %s111, %s113
      %p120 = scmp.eq.s32.totalorder %s19, 1
      %p121 = por %p119, %p120
      %p122 = scmp.ne.s32.totalorder %s113, %s114
      %p123 = scmp.eq.s32.totalorder %s19, 0
      %p124 = por %p122, %p123
      %p125 = scmp.ne.s32.totalorder %s113, %s114
      %p126 = scmp.eq.s32.totalorder %s20, 1
      %p127 = por %p125, %p126
      %p129 = scmp.ne.s32.totalorder %s114, %s128
      %p130 = scmp.eq.s32.totalorder %s20, 0
      %p131 = por %p129, %p130
      %s133 = sadd.s32 %s132, 1
      %p136 = scmp.eq.s32.totalorder %s14, 1
      %p137 = scmp.ne.s32.totalorder %s132, %s134
      %p138 = scmp.eq.s32.totalorder %s14, 0
      %p139 = por %p137, %p138
      %p140 = scmp.ne.s32.totalorder %s132, %s134
      %p141 = scmp.eq.s32.totalorder %s19, 1
      %p142 = por %p140, %p141
      %p143 = scmp.ne.s32.totalorder %s134, %s135
      %p144 = scmp.eq.s32.totalorder %s19, 0
      %p145 = por %p143, %p144
      %p146 = scmp.ne.s32.totalorder %s134, %s135
      %p147 = scmp.eq.s32.totalorder %s20, 1
      %p148 = por %p146, %p147
      %p150 = scmp.ne.s32.totalorder %s135, %s149
      %p151 = scmp.eq.s32.totalorder %s20, 0
      %p152 = por %p150, %p151
      %s154 = sadd.s32 %s153, 1
      %p157 = scmp.eq.s32.totalorder %s14, 1
      %p158 = scmp.ne.s32.totalorder %s153, %s155
      %p159 = scmp.eq.s32.totalorder %s14, 0
      %p160 = por %p158, %p159
      %p161 = scmp.ne.s32.totalorder %s153, %s155
      %p162 = scmp.eq.s32.totalorder %s19, 1
      %p163 = por %p161, %p162
      %p164 = scmp.ne.s32.totalorder %s155, %s156
      %p165 = scmp.eq.s32.totalorder %s19, 0
      %p166 = por %p164, %p165
      %p167 = scmp.ne.s32.totalorder %s155, %s156
      %p168 = scmp.eq.s32.totalorder %s20, 1
      %p169 = por %p167, %p168
      %p171 = scmp.ne.s32.totalorder %s156, %s170
      %p172 = scmp.eq.s32.totalorder %s20, 0
      %p173 = por %p171, %p172
      %s175 = sadd.s32 %s174, 1
      %p178 = scmp.eq.s32.totalorder %s14, 1
      %p179 = scmp.ne.s32.totalorder %s174, %s176
      %p180 = scmp.eq.s32.totalorder %s14, 0
      %p181 = por %p179, %p180
      %p182 = scmp.ne.s32.totalorder %s174, %s176
      %p183 = scmp.eq.s32.totalorder %s19, 1
      %p184 = por %p182, %p183
      %p185 = scmp.ne.s32.totalorder %s176, %s177
      %p186 = scmp.eq.s32.totalorder %s19, 0
      %p187 = por %p185, %p186
      %p188 = scmp.ne.s32.totalorder %s176, %s177
      %p189 = scmp.eq.s32.totalorder %s20, 1
      %p190 = por %p188, %p189
      %p192 = scmp.ne.s32.totalorder %s177, %s191
      %p193 = scmp.eq.s32.totalorder %s20, 0
      %p194 = por %p192, %p193
      %s195 = ssub.s32 %s14, %s21
      %p196 = scmp.eq.s32.totalorder %s195, 0
      %s198 = sadd.s32 %s197, 1
      %s199 = scalar_select %p196, %s197, %s198
      %p202 = pneg %p196
      %p203 = scmp.eq.s32.totalorder %s14, 1
      %p204 = por %p202, %p203
      %p205 = scmp.ne.s32.totalorder %s197, %s200
      %p206 = scmp.eq.s32.totalorder %s14, 0
      %p207 = por %p205, %p206
      %p208 = scmp.ne.s32.totalorder %s197, %s200
      %p209 = scmp.eq.s32.totalorder %s19, 1
      %p210 = por %p208, %p209
      %p211 = scmp.ne.s32.totalorder %s200, %s201
      %p212 = scmp.eq.s32.totalorder %s19, 0
      %p213 = por %p211, %p212
      %p214 = scmp.ne.s32.totalorder %s200, %s201
      %p215 = scmp.eq.s32.totalorder %s20, 1
      %p216 = por %p214, %p215
      %p218 = scmp.ne.s32.totalorder %s201, %s217
      %p219 = scmp.eq.s32.totalorder %s20, 0
      %p220 = por %p218, %p219
      %p221 = scmp.le.s32.totalorder 1, %s14
      %p222 = scmp.lt.s32.totalorder %s14, 3
      %p223 = pnand %p221, %p222
      %p224 = pneg %p223
      // Predicated region
      $region9: #{bottleneck_forward.1} parent=5 // pred_check
        _
      $region10: #{bottleneck_forward.1} parent=5 // pred_check_branch
        %226 = sbr.rel (%p223) target = $region12
      $region11: #{bottleneck_forward.1} parent=5 // pred_region
        %s227 = ssub.s32 %s14, 1
        // Predicated region
        $region13: #{bottleneck_forward.1} parent=11 // pred_check
          %p228 = pneg %p61
        $region14: #{bottleneck_forward.1} parent=11 // pred_check_branch
          %230 = sbr.rel (%p228) target = $region16
        $region15: #{bottleneck_forward.1} parent=11 // pred_region
          _
        $region16: #{bottleneck_forward.1} parent=11 // pred_fallthru
          _
        // Predicated region
        $region17: #{bottleneck_forward.1} parent=11 // pred_check
          %p231 = pneg %p82
        $region18: #{bottleneck_forward.1} parent=11 // pred_check_branch
          %233 = sbr.rel (%p231) target = $region20
        $region19: #{bottleneck_forward.1} parent=11 // pred_region
          _
        $region20: #{bottleneck_forward.1} parent=11 // pred_fallthru
          _
        // Predicated region
        $region21: #{bottleneck_forward.1} parent=11 // pred_check
          %p234 = pneg %p103
        $region22: #{bottleneck_forward.1} parent=11 // pred_check_branch
          %236 = sbr.rel (%p234) target = $region24
        $region23: #{bottleneck_forward.1} parent=11 // pred_region
          _
        $region24: #{bottleneck_forward.1} parent=11 // pred_fallthru
          _
        // Predicated region
        $region25: #{bottleneck_forward.1} parent=11 // pred_check
          %p237 = pneg %p124
        $region26: #{bottleneck_forward.1} parent=11 // pred_check_branch
          %239 = sbr.rel (%p237) target = $region28
        $region27: #{bottleneck_forward.1} parent=11 // pred_region
          _
        $region28: #{bottleneck_forward.1} parent=11 // pred_fallthru
          _
        // Predicated region
        $region29: #{bottleneck_forward.1} parent=11 // pred_check
          %p240 = pneg %p145
        $region30: #{bottleneck_forward.1} parent=11 // pred_check_branch
          %242 = sbr.rel (%p240) target = $region32
        $region31: #{bottleneck_forward.1} parent=11 // pred_region
          _
        $region32: #{bottleneck_forward.1} parent=11 // pred_fallthru
          _
        // Predicated region
        $region33: #{bottleneck_forward.1} parent=11 // pred_check
          %p243 = pneg %p166
        $region34: #{bottleneck_forward.1} parent=11 // pred_check_branch
          %245 = sbr.rel (%p243) target = $region36
        $region35: #{bottleneck_forward.1} parent=11 // pred_region
          _
        $region36: #{bottleneck_forward.1} parent=11 // pred_fallthru
          _
        // Predicated region
        $region37: #{bottleneck_forward.1} parent=11 // pred_check
          %p246 = pneg %p187
        $region38: #{bottleneck_forward.1} parent=11 // pred_check_branch
          %248 = sbr.rel (%p246) target = $region40
        $region39: #{bottleneck_forward.1} parent=11 // pred_region
          _
        $region40: #{bottleneck_forward.1} parent=11 // pred_fallthru
          _
      $region12: #{bottleneck_forward.1} parent=5 // pred_fallthru
        _
      %p249 = scmp.lt.s32.totalorder %s14, 2
      // Predicated region
      $region41: #{bottleneck_forward.1} parent=5 // pred_check
        %p250 = pneg %p249
      $region42: #{bottleneck_forward.1} parent=5 // pred_check_branch
        %252 = sbr.rel (%p250) target = $region44
      $region43: #{bottleneck_forward.1} parent=5 // pred_region
        // Predicated region
        $region45: #{bottleneck_forward.1} parent=43 // pred_check
          %p253 = pneg %p34
        $region46: #{bottleneck_forward.1} parent=43 // pred_check_branch
          %255 = sbr.rel (%p253) target = $region48
        $region47: #{bottleneck_forward.1} parent=43 // pred_region
          %s256 = sand.u32 %s24, 1
          %s257 = sand.u32 %s24, 1
          %s258 = smul.addr %s257, 64
          %s259 = scalar_lea.vmem [#allocation3], %s258
          %s260 = smul.u32 4, %s14
          %s261 = smul.addr %s260, 8
          %s262 = scalar_lea.vmem %s0, %s261
          // Predicated region
          $region49: #{bottleneck_forward.1} parent=47 // pred_check
            _
          $region50: #{bottleneck_forward.1} parent=47 // pred_check_branch
            %264 = sbr.rel (0) target = $region52
          $region51: #{bottleneck_forward.1} parent=47 // pred_region
            // Predicated region
            $region53: #{bottleneck_forward.1} parent=51 // pred_check
              _
            $region54: #{bottleneck_forward.1} parent=51 // pred_check_branch
              %266 = sbr.rel (0) target = $region56
            $region55: #{bottleneck_forward.1} parent=51 // pred_region
              loop: start=0, step=1, limit=1
              $region57: #{bottleneck_forward.1} parent=55 // loop_pre_header
                _
              $region58: #{bottleneck_forward.1} parent=55 // loop_header
                %s268 = sphi 0, %s272
                %p269 = scmp.ge.s32.totalorder %s268, 1
                %s273 = sphi %s262, %s262
                %s274 = sphi %s259, %s259
              $region59: #{bottleneck_forward.1} parent=55 // loop_header_branch
                %271 = sbr.rel (%p269) target = $region63
              $region60: #{bottleneck_forward.1} parent=55 // loop_body
                %v275 = vld [vmem:[%s273] sm:$0xff]
                %276 = vst [vmem:[%s274] sm:$0xff] %v275
                %v277 = vld [vmem:[%s273 + $0x8] sm:$0xff]
                %278 = vst [vmem:[%s274 + $0x8] sm:$0xff] %v277
                %v279 = vld [vmem:[%s273 + $0x10] sm:$0xff]
                %280 = vst [vmem:[%s274 + $0x10] sm:$0xff] %v279
                %v281 = vld [vmem:[%s273 + $0x18] sm:$0xff]
                %282 = vst [vmem:[%s274 + $0x18] sm:$0xff] %v281
                %v283 = vld [vmem:[%s273 + $0x40] sm:$0xff]
                %284 = vst [vmem:[%s274 + $0x20] sm:$0xff] %v283
                %v285 = vld [vmem:[%s273 + $0x48] sm:$0xff]
                %286 = vst [vmem:[%s274 + $0x28] sm:$0xff] %v285
                %v287 = vld [vmem:[%s273 + $0x50] sm:$0xff]
                %288 = vst [vmem:[%s274 + $0x30] sm:$0xff] %v287
                %v289 = vld [vmem:[%s273 + $0x58] sm:$0xff]
                %290 = vst [vmem:[%s274 + $0x38] sm:$0xff] %v289
              $region61: #{bottleneck_forward.1} parent=55 // loop_footer
                %s272 = sadd.s32 1, %s268
              $region62: #{bottleneck_forward.1} parent=55 // loop_footer_branch
                %267 = sbr.rel target = $region58
              $region63: #{bottleneck_forward.1} parent=55 // loop_exit
                _
            $region56: #{bottleneck_forward.1} parent=51 // pred_fallthru
              _
            // Predicated region
            $region64: #{bottleneck_forward.1} parent=51 // pred_check
              _
            $region65: #{bottleneck_forward.1} parent=51 // pred_check_branch
              %292 = sbr.rel target = $region67
            $region66: #{bottleneck_forward.1} parent=51 // pred_region
              _
            $region67: #{bottleneck_forward.1} parent=51 // pred_fallthru
              _
          $region52: #{bottleneck_forward.1} parent=47 // pred_fallthru
            _
          %293 = vnop
        $region48: #{bottleneck_forward.1} parent=43 // pred_fallthru
          _
      $region44: #{bottleneck_forward.1} parent=5 // pred_fallthru
        _
      %p294 = scmp.le.s32.totalorder 1, %s14
      %p295 = scmp.lt.s32.totalorder %s14, 3
      %p296 = pnand %p294, %p295
      %p297 = pneg %p296
      // Predicated region
      $region68: #{bottleneck_forward.1} parent=5 // pred_check
        _
      $region69: #{bottleneck_forward.1} parent=5 // pred_check_branch
        %299 = sbr.rel (%p296) target = $region71
      $region70: #{bottleneck_forward.1} parent=5 // pred_region
        %s300 = ssub.s32 %s14, 1
        %s301 = sand.u32 %s27, 1
        %s302 = sand.u32 %s27, 1
        %s303 = smul.addr %s302, 64
        %s304 = scalar_lea.vmem [#allocation3], %s303
        // Predicated region
        $region72: #{bottleneck_forward.1} parent=70 // pred_check
          %p305 = pneg %p40
        $region73: #{bottleneck_forward.1} parent=70 // pred_check_branch
          %307 = sbr.rel (%p305) target = $region75
        $region74: #{bottleneck_forward.1} parent=70 // pred_region
          _
        $region75: #{bottleneck_forward.1} parent=70 // pred_fallthru
          _
        %s308 = sand.u32 %s27, 1
        %s309 = sand.u32 %s27, 1
        %s310 = smul.addr %s309, 64
        %s311 = scalar_lea.vmem [#allocation3], %s310
        %p312 = pneg %p40
        %p313 = pneg %p37
        %p314 = pneg %p61
        %p315 = pneg %p58
        %p316 = pneg %p82
        %p317 = pneg %p79
        %p318 = pneg %p103
        %p319 = pneg %p100
        %p320 = pneg %p124
        %p321 = pneg %p121
        %p322 = pneg %p145
        %p323 = pneg %p142
        %p324 = pneg %p166
        %p325 = pneg %p163
        %p326 = pneg %p187
        %p327 = pneg %p184
        %p328 = pneg %p213
        %p329 = pneg %p210
        %s330 = sand.u32 %s200, 1
        %s331 = sand.u32 %s200, 1
        %s332 = smul.addr %s331, 64
        %s333 = scalar_lea.vmem [#allocation4], %s332
        %s334 = smul.u32 4, %s19
        %s335 = smul.u32 4, %s19
        %v336 = vld [vmem:[%s2] sm:$0xf]
        %v337 = vld [vmem:[%s304] sm:$0xff]
        %v338 = vld [vmem:[%s304 + $0x8] sm:$0xff]
        %v339 = vld [vmem:[%s304 + $0x10] sm:$0xff]
        %v340 = vld [vmem:[%s304 + $0x18] sm:$0xff]
        %v341 = vld [vmem:[%s304 + $0x20] sm:$0xff]
        %v342 = vld [vmem:[%s304 + $0x28] sm:$0xff]
        %v343 = vld [vmem:[%s304 + $0x30] sm:$0xff]
        %v344 = vld [vmem:[%s304 + $0x38] sm:$0xff]
        %v345 = vld [vmem:[%s3] sm:$0xf]
        %347 = vset.pattern.permute.xlu0 0
        %348 = vperm.xlu0 %347, %v345
        %v349 = vpop.permute.xlu0 %348
        %vm351 = vcmask 130048
        %v353 = vsel %vm351, %v336, 0
        %355 = vmatprep.subr.mxu0 %v338
        %356 = vmatpush1.msra.mxu0 %v337
        %357 = vmatprep.subr.mxu0 %v342
        %358 = vmatpush1.msra.mxu0 %v341
        %359 = vmatprep.subr.mxu0 0.0
        %360 = vmatpush1.msra.mxu0 0.0
        %361 = vmatprep.subr.mxu0 0.0
        %362 = vmatpush1.msra.mxu0 0.0
        %363 = vmatprep.subr.mxu0 0.0
        %364 = vmatpush1.msra.mxu0 0.0
        %365 = vmatprep.subr.mxu0 0.0
        %366 = vmatpush1.msra.mxu0 0.0
        %367 = vmatprep.subr.mxu0 0.0
        %368 = vmatpush1.msra.mxu0 0.0
        %369 = vmatprep.subr.mxu0 0.0
        %370 = vmatpush1.msra.mxu0 0.0
        %371 = vmatprep.subr.mxu0 0.0
        %372 = vmatpush1.msra.mxu0 0.0
        %373 = vmatprep.subr.mxu0 0.0
        %374 = vmatpush1.msra.mxu0 0.0
        %375 = vmatprep.subr.mxu0 0.0
        %376 = vmatpush1.msra.mxu0 0.0
        %377 = vmatprep.subr.mxu0 0.0
        %378 = vmatpush1.msra.mxu0 0.0
        %379 = vmatprep.subr.mxu0 0.0
        %380 = vmatpush1.msra.mxu0 0.0
        %381 = vmatprep.subr.mxu0 0.0
        %382 = vmatpush1.msra.mxu0 0.0
        %383 = vmatprep.subr.mxu0 0.0
        %384 = vmatpush1.msra.mxu0 0.0
        %385 = vmatprep.subr.mxu0 0.0
        %386 = vmatpush1.msra.mxu0 0.0
        %387 = vmatprep.subr.mxu0 0.0
        %388 = vmatpush1.msra.mxu0 0.0
        %389 = vmatprep.subr.mxu0 0.0
        %390 = vmatpush1.msra.mxu0 0.0
        %391 = vmatprep.subr.mxu0 0.0
        %392 = vmatpush1.msra.mxu0 0.0
        %393 = vmatprep.subr.mxu0 0.0
        %394 = vmatpush1.msra.mxu0 0.0
        %395 = vmatprep.subr.mxu0 0.0
        %396 = vmatpush1.msra.mxu0 0.0
        %397 = vmatprep.subr.mxu0 0.0
        %398 = vmatpush1.msra.mxu0 0.0
        %399 = vmatprep.subr.mxu0 0.0
        %400 = vmatpush1.msra.mxu0 0.0
        %401 = vmatprep.subr.mxu0 0.0
        %402 = vmatpush1.msra.mxu0 0.0
        %403 = vmatprep.subr.mxu0 0.0
        %404 = vmatpush1.msra.mxu0 0.0
        %405 = vmatprep.subr.mxu0 0.0
        %406 = vmatpush1.msra.mxu0 0.0
        %407 = vmatprep.subr.mxu0 0.0
        %408 = vmatpush1.msra.mxu0 0.0
        %409 = vmatprep.subr.mxu0 0.0
        %410 = vmatpush1.msra.mxu0 0.0
        %411 = vmatprep.subr.mxu0 0.0
        %412 = vmatpush1.msra.mxu0 0.0
        %413 = vmatprep.subr.mxu0 0.0
        %414 = vmatpush1.msra.mxu0 0.0
        %415 = vmatprep.subr.mxu0 0.0
        %416 = vmatpush1.msra.mxu0 0.0
        %417 = vmatprep.subr.mxu0 0.0
        %418 = vmatpush1.msra.mxu0 0.0
        %419 = vmatprep.mubr.f32.mxu0 0.0
        %420 = vmatmul.mubr.f32.gmra.mrb[0].mxu0 %v353
        %v421 = vpop.f32.mrb[0].mxu0
        %v422 = vadd.f32 %v349, %v421
        %v423 = vpop.f32.mrb[0].mxu0
        %v424 = vadd.f32 %v349, %v423
        %425 = vdwg.mxu0
        %426 = vmatprep.subr.mxu0 %v340
        %427 = vmatpush1.msra.mxu0 %v339
        %428 = vmatprep.subr.mxu0 %v344
        %429 = vmatpush1.msra.mxu0 %v343
        %430 = vmatprep.subr.mxu0 0.0
        %431 = vmatpush1.msra.mxu0 0.0
        %432 = vmatprep.subr.mxu0 0.0
        %433 = vmatpush1.msra.mxu0 0.0
        %434 = vmatprep.subr.mxu0 0.0
        %435 = vmatpush1.msra.mxu0 0.0
        %436 = vmatprep.subr.mxu0 0.0
        %437 = vmatpush1.msra.mxu0 0.0
        %438 = vmatprep.subr.mxu0 0.0
        %439 = vmatpush1.msra.mxu0 0.0
        %440 = vmatprep.subr.mxu0 0.0
        %441 = vmatpush1.msra.mxu0 0.0
        %442 = vmatprep.subr.mxu0 0.0
        %443 = vmatpush1.msra.mxu0 0.0
        %444 = vmatprep.subr.mxu0 0.0
        %445 = vmatpush1.msra.mxu0 0.0
        %446 = vmatprep.subr.mxu0 0.0
        %447 = vmatpush1.msra.mxu0 0.0
        %448 = vmatprep.subr.mxu0 0.0
        %449 = vmatpush1.msra.mxu0 0.0
        %450 = vmatprep.subr.mxu0 0.0
        %451 = vmatpush1.msra.mxu0 0.0
        %452 = vmatprep.subr.mxu0 0.0
        %453 = vmatpush1.msra.mxu0 0.0
        %454 = vmatprep.subr.mxu0 0.0
        %455 = vmatpush1.msra.mxu0 0.0
        %456 = vmatprep.subr.mxu0 0.0
        %457 = vmatpush1.msra.mxu0 0.0
        %458 = vmatprep.subr.mxu0 0.0
        %459 = vmatpush1.msra.mxu0 0.0
        %460 = vmatprep.subr.mxu0 0.0
        %461 = vmatpush1.msra.mxu0 0.0
        %462 = vmatprep.subr.mxu0 0.0
        %463 = vmatpush1.msra.mxu0 0.0
        %464 = vmatprep.subr.mxu0 0.0
        %465 = vmatpush1.msra.mxu0 0.0
        %466 = vmatprep.subr.mxu0 0.0
        %467 = vmatpush1.msra.mxu0 0.0
        %468 = vmatprep.subr.mxu0 0.0
        %469 = vmatpush1.msra.mxu0 0.0
        %470 = vmatprep.subr.mxu0 0.0
        %471 = vmatpush1.msra.mxu0 0.0
        %472 = vmatprep.subr.mxu0 0.0
        %473 = vmatpush1.msra.mxu0 0.0
        %474 = vmatprep.subr.mxu0 0.0
        %475 = vmatpush1.msra.mxu0 0.0
        %476 = vmatprep.subr.mxu0 0.0
        %477 = vmatpush1.msra.mxu0 0.0
        %478 = vmatprep.subr.mxu0 0.0
        %479 = vmatpush1.msra.mxu0 0.0
        %480 = vmatprep.subr.mxu0 0.0
        %481 = vmatpush1.msra.mxu0 0.0
        %482 = vmatprep.subr.mxu0 0.0
        %483 = vmatpush1.msra.mxu0 0.0
        %484 = vmatprep.subr.mxu0 0.0
        %485 = vmatpush1.msra.mxu0 0.0
        %486 = vmatprep.subr.mxu0 0.0
        %487 = vmatpush1.msra.mxu0 0.0
        %488 = vmatprep.subr.mxu0 0.0
        %489 = vmatpush1.msra.mxu0 0.0
        %490 = vmatprep.mubr.f32.mxu0 0.0
        %491 = vmatmul.mubr.f32.gmra.mrb[0].mxu0 %v353
        %v492 = vpop.f32.mrb[0].mxu0
        %v493 = vadd.f32 %v349, %v492
        %v494 = vpop.f32.mrb[0].mxu0
        %v495 = vadd.f32 %v349, %v494
        %496 = vdwg.mxu0
        %v497 = vmax.f32 %v422, 0.0
        %v498 = vmax.f32 %v424, 0.0
        %v499 = vmax.f32 %v493, 0.0
        %v500 = vmax.f32 %v495, 0.0
        %501 = vrot.lane.b32.xlu0 %v497, 17
        %v502 = vpop.permute.xlu0 %501
        %503 = vrot.lane.b32.xlu0 %v498, 17
        %v504 = vpop.permute.xlu0 %503
        %505 = vrot.lane.b32.xlu0 %v499, 17
        %v506 = vpop.permute.xlu0 %505
        %507 = vrot.lane.b32.xlu0 %v500, 17
        %v508 = vpop.permute.xlu0 %507
        %v509 = vlaneseq
        %v510 = vand.u32 %v509, 127
        %vm511 = vcmp.lt.s32.totalorder %v510, 17
        %v512 = vsel %vm511, %v506, %v508
        %v513 = vsel %vm511, %v504, %v506
        %v514 = vsel %vm511, %v502, %v504
        %v515 = vsel %vm511, %v508, %v502
        %v516 = vld [vmem:[%s1] sm:$0xf]
        %v518 = vlaneseq
        %v519 = vshrl.u32 %v518, 7
        %v520 = vsub.s32 0, %v519
        %v521 = vrot.slane %v516, %v520
        %v522 = vlaneseq
        %v523 = vshrl.u32 %v522, 7
        %v524 = vsub.s32 1, %v523
        %v525 = vrot.slane %v516, %v524
        %v526 = vlaneseq
        %v527 = vshrl.u32 %v526, 7
        %v528 = vsub.s32 2, %v527
        %v529 = vrot.slane %v516, %v528
        %v530 = vlaneseq
        %v531 = vshrl.u32 %v530, 7
        %v532 = vsub.s32 3, %v531
        %v533 = vrot.slane %v516, %v532
        %v538 = vmul.f32 %v515, %v521
        %v539 = vmul.f32 %v514, %v525
        %v540 = vmul.f32 %v513, %v529
        %v541 = vmul.f32 %v512, %v533
        %542 = vst [vmem:[#allocation2] sm:$0xf] %v538
        %543 = vst [vmem:[#allocation2 + $0x8] sm:$0xf] %v539
        %544 = vst [vmem:[#allocation2 + $0x10] sm:$0xf] %v540
        %545 = vst [vmem:[#allocation2 + $0x18] sm:$0xf] %v541
        %546 = vrot.lane.b32.xlu0 %v497, 16
        %v547 = vpop.permute.xlu0 %546
        %548 = vrot.lane.b32.xlu0 %v498, 16
        %v549 = vpop.permute.xlu0 %548
        %550 = vrot.lane.b32.xlu0 %v499, 16
        %v551 = vpop.permute.xlu0 %550
        %552 = vrot.lane.b32.xlu0 %v500, 16
        %v553 = vpop.permute.xlu0 %552
        %vm554 = vcmp.lt.s32.totalorder %v510, 16
        %v555 = vsel %vm554, %v551, %v553
        %v556 = vsel %vm554, %v549, %v551
        %v557 = vsel %vm554, %v547, %v549
        %v558 = vsel %vm554, %v553, %v547
        %s559 = scalar_lea.vmem %s1, 4
        %v560 = vld [vmem:[%s559] sm:$0xf]
        %v562 = vlaneseq
        %v563 = vshrl.u32 %v562, 7
        %v564 = vsub.s32 0, %v563
        %v565 = vrot.slane %v560, %v564
        %v566 = vlaneseq
        %v567 = vshrl.u32 %v566, 7
        %v568 = vsub.s32 1, %v567
        %v569 = vrot.slane %v560, %v568
        %v570 = vlaneseq
        %v571 = vshrl.u32 %v570, 7
        %v572 = vsub.s32 2, %v571
        %v573 = vrot.slane %v560, %v572
        %v574 = vlaneseq
        %v575 = vshrl.u32 %v574, 7
        %v576 = vsub.s32 3, %v575
        %v577 = vrot.slane %v560, %v576
        %v582 = vmul.f32 %v558, %v565
        %v583 = vmul.f32 %v557, %v569
        %v584 = vmul.f32 %v556, %v573
        %v585 = vmul.f32 %v555, %v577
        %v590 = vrot.slane %v582, 4
        %v591 = vrot.slane %v583, 4
        %v592 = vrot.slane %v584, 4
        %v593 = vrot.slane %v585, 4
        %598 = vst [vmem:[#allocation2] sm:$0xf0] %v590
        %599 = vst [vmem:[#allocation2 + $0x8] sm:$0xf0] %v591
        %600 = vst [vmem:[#allocation2 + $0x10] sm:$0xf0] %v592
        %601 = vst [vmem:[#allocation2 + $0x18] sm:$0xf0] %v593
        %602 = vrot.lane.b32.xlu0 %v497, 15
        %v603 = vpop.permute.xlu0 %602
        %604 = vrot.lane.b32.xlu0 %v498, 15
        %v605 = vpop.permute.xlu0 %604
        %606 = vrot.lane.b32.xlu0 %v499, 15
        %v607 = vpop.permute.xlu0 %606
        %608 = vrot.lane.b32.xlu0 %v500, 15
        %v609 = vpop.permute.xlu0 %608
        %vm610 = vcmp.lt.s32.totalorder %v510, 15
        %v611 = vsel %vm610, %v607, %v609
        %v612 = vsel %vm610, %v605, %v607
        %v613 = vsel %vm610, %v603, %v605
        %v614 = vsel %vm610, %v609, %v603
        %s615 = scalar_lea.vmem %s1, 8
        %v616 = vld [vmem:[%s615] sm:$0xf]
        %v618 = vlaneseq
        %v619 = vshrl.u32 %v618, 7
        %v620 = vsub.s32 0, %v619
        %v621 = vrot.slane %v616, %v620
        %v622 = vlaneseq
        %v623 = vshrl.u32 %v622, 7
        %v624 = vsub.s32 1, %v623
        %v625 = vrot.slane %v616, %v624
        %v626 = vlaneseq
        %v627 = vshrl.u32 %v626, 7
        %v628 = vsub.s32 2, %v627
        %v629 = vrot.slane %v616, %v628
        %v630 = vlaneseq
        %v631 = vshrl.u32 %v630, 7
        %v632 = vsub.s32 3, %v631
        %v633 = vrot.slane %v616, %v632
        %v638 = vmul.f32 %v614, %v621
        %v639 = vmul.f32 %v613, %v625
        %v640 = vmul.f32 %v612, %v629
        %v641 = vmul.f32 %v611, %v633
        %642 = vst [vmem:[#allocation2 + $0x20] sm:$0xf] %v638
        %643 = vst [vmem:[#allocation2 + $0x28] sm:$0xf] %v639
        %644 = vst [vmem:[#allocation2 + $0x30] sm:$0xf] %v640
        %645 = vst [vmem:[#allocation2 + $0x38] sm:$0xf] %v641
        %646 = vrot.lane.b32.xlu0 %v497, 1
        %v647 = vpop.permute.xlu0 %646
        %648 = vrot.lane.b32.xlu0 %v498, 1
        %v649 = vpop.permute.xlu0 %648
        %650 = vrot.lane.b32.xlu0 %v499, 1
        %v651 = vpop.permute.xlu0 %650
        %652 = vrot.lane.b32.xlu0 %v500, 1
        %v653 = vpop.permute.xlu0 %652
        %vm654 = vcmp.lt.s32.totalorder %v510, 1
        %v655 = vsel %vm654, %v651, %v653
        %v656 = vsel %vm654, %v649, %v651
        %v657 = vsel %vm654, %v647, %v649
        %v658 = vsel %vm654, %v653, %v647
        %s659 = scalar_lea.vmem %s1, 12
        %v660 = vld [vmem:[%s659] sm:$0xf]
        %v662 = vlaneseq
        %v663 = vshrl.u32 %v662, 7
        %v664 = vsub.s32 0, %v663
        %v665 = vrot.slane %v660, %v664
        %v666 = vlaneseq
        %v667 = vshrl.u32 %v666, 7
        %v668 = vsub.s32 1, %v667
        %v669 = vrot.slane %v660, %v668
        %v670 = vlaneseq
        %v671 = vshrl.u32 %v670, 7
        %v672 = vsub.s32 2, %v671
        %v673 = vrot.slane %v660, %v672
        %v674 = vlaneseq
        %v675 = vshrl.u32 %v674, 7
        %v676 = vsub.s32 3, %v675
        %v677 = vrot.slane %v660, %v676
        %v682 = vmul.f32 %v658, %v665
        %v683 = vmul.f32 %v657, %v669
        %v684 = vmul.f32 %v656, %v673
        %v685 = vmul.f32 %v655, %v677
        %v690 = vrot.slane %v682, 4
        %v691 = vrot.slane %v683, 4
        %v692 = vrot.slane %v684, 4
        %v693 = vrot.slane %v685, 4
        %698 = vst [vmem:[#allocation2 + $0x20] sm:$0xf0] %v690
        %699 = vst [vmem:[#allocation2 + $0x28] sm:$0xf0] %v691
        %700 = vst [vmem:[#allocation2 + $0x30] sm:$0xf0] %v692
        %701 = vst [vmem:[#allocation2 + $0x38] sm:$0xf0] %v693
        %s702 = scalar_lea.vmem %s1, 16
        %v703 = vld [vmem:[%s702] sm:$0xf]
        %v705 = vlaneseq
        %v706 = vshrl.u32 %v705, 7
        %v707 = vsub.s32 0, %v706
        %v708 = vrot.slane %v703, %v707
        %v709 = vlaneseq
        %v710 = vshrl.u32 %v709, 7
        %v711 = vsub.s32 1, %v710
        %v712 = vrot.slane %v703, %v711
        %v713 = vlaneseq
        %v714 = vshrl.u32 %v713, 7
        %v715 = vsub.s32 2, %v714
        %v716 = vrot.slane %v703, %v715
        %v717 = vlaneseq
        %v718 = vshrl.u32 %v717, 7
        %v719 = vsub.s32 3, %v718
        %v720 = vrot.slane %v703, %v719
        %v725 = vmul.f32 %v497, %v708
        %v726 = vmul.f32 %v498, %v712
        %v727 = vmul.f32 %v499, %v716
        %v728 = vmul.f32 %v500, %v720
        %729 = vst [vmem:[#allocation2 + $0x40] sm:$0xf] %v725
        %730 = vst [vmem:[#allocation2 + $0x48] sm:$0xf] %v726
        %731 = vst [vmem:[#allocation2 + $0x50] sm:$0xf] %v727
        %732 = vst [vmem:[#allocation2 + $0x58] sm:$0xf] %v728
        %733 = vrot.lane.b32.xlu0 %v497, 127
        %v734 = vpop.permute.xlu0 %733
        %735 = vrot.lane.b32.xlu0 %v498, 127
        %v736 = vpop.permute.xlu0 %735
        %737 = vrot.lane.b32.xlu0 %v499, 127
        %v738 = vpop.permute.xlu0 %737
        %739 = vrot.lane.b32.xlu0 %v500, 127
        %v740 = vpop.permute.xlu0 %739
        %vm741 = vcmp.lt.s32.totalorder %v510, 127
        %v742 = vsel %vm741, %v738, %v740
        %v743 = vsel %vm741, %v736, %v738
        %v744 = vsel %vm741, %v734, %v736
        %v745 = vsel %vm741, %v740, %v734
        %s746 = scalar_lea.vmem %s1, 20
        %v747 = vld [vmem:[%s746] sm:$0xf]
        %v749 = vlaneseq
        %v750 = vshrl.u32 %v749, 7
        %v751 = vsub.s32 0, %v750
        %v752 = vrot.slane %v747, %v751
        %v753 = vlaneseq
        %v754 = vshrl.u32 %v753, 7
        %v755 = vsub.s32 1, %v754
        %v756 = vrot.slane %v747, %v755
        %v757 = vlaneseq
        %v758 = vshrl.u32 %v757, 7
        %v759 = vsub.s32 2, %v758
        %v760 = vrot.slane %v747, %v759
        %v761 = vlaneseq
        %v762 = vshrl.u32 %v761, 7
        %v763 = vsub.s32 3, %v762
        %v764 = vrot.slane %v747, %v763
        %v769 = vmul.f32 %v744, %v752
        %v770 = vmul.f32 %v743, %v756
        %v771 = vmul.f32 %v742, %v760
        %v772 = vmul.f32 %v745, %v764
        %v777 = vrot.slane %v769, 4
        %v778 = vrot.slane %v770, 4
        %v779 = vrot.slane %v771, 4
        %v780 = vrot.slane %v772, 4
        %785 = vst [vmem:[#allocation2 + $0x40] sm:$0xf0] %v777
        %786 = vst [vmem:[#allocation2 + $0x48] sm:$0xf0] %v778
        %787 = vst [vmem:[#allocation2 + $0x50] sm:$0xf0] %v779
        %788 = vst [vmem:[#allocation2 + $0x58] sm:$0xf0] %v780
        %789 = vrot.lane.b32.xlu0 %v497, 113
        %v790 = vpop.permute.xlu0 %789
        %791 = vrot.lane.b32.xlu0 %v498, 113
        %v792 = vpop.permute.xlu0 %791
        %793 = vrot.lane.b32.xlu0 %v499, 113
        %v794 = vpop.permute.xlu0 %793
        %795 = vrot.lane.b32.xlu0 %v500, 113
        %v796 = vpop.permute.xlu0 %795
        %vm797 = vcmp.lt.s32.totalorder %v510, 113
        %v798 = vsel %vm797, %v794, %v796
        %v799 = vsel %vm797, %v792, %v794
        %v800 = vsel %vm797, %v790, %v792
        %v801 = vsel %vm797, %v796, %v790
        %s802 = scalar_lea.vmem %s1, 24
        %v803 = vld [vmem:[%s802] sm:$0xf]
        %v805 = vlaneseq
        %v806 = vshrl.u32 %v805, 7
        %v807 = vsub.s32 0, %v806
        %v808 = vrot.slane %v803, %v807
        %v809 = vlaneseq
        %v810 = vshrl.u32 %v809, 7
        %v811 = vsub.s32 1, %v810
        %v812 = vrot.slane %v803, %v811
        %v813 = vlaneseq
        %v814 = vshrl.u32 %v813, 7
        %v815 = vsub.s32 2, %v814
        %v816 = vrot.slane %v803, %v815
        %v817 = vlaneseq
        %v818 = vshrl.u32 %v817, 7
        %v819 = vsub.s32 3, %v818
        %v820 = vrot.slane %v803, %v819
        %v825 = vmul.f32 %v800, %v808
        %v826 = vmul.f32 %v799, %v812
        %v827 = vmul.f32 %v798, %v816
        %v828 = vmul.f32 %v801, %v820
        %829 = vst [vmem:[#allocation2 + $0x60] sm:$0xf] %v825
        %830 = vst [vmem:[#allocation2 + $0x68] sm:$0xf] %v826
        %831 = vst [vmem:[#allocation2 + $0x70] sm:$0xf] %v827
        %832 = vst [vmem:[#allocation2 + $0x78] sm:$0xf] %v828
        %833 = vrot.lane.b32.xlu0 %v497, 112
        %v834 = vpop.permute.xlu0 %833
        %835 = vrot.lane.b32.xlu0 %v498, 112
        %v836 = vpop.permute.xlu0 %835
        %837 = vrot.lane.b32.xlu0 %v499, 112
        %v838 = vpop.permute.xlu0 %837
        %839 = vrot.lane.b32.xlu0 %v500, 112
        %v840 = vpop.permute.xlu0 %839
        %vm841 = vcmp.lt.s32.totalorder %v510, 112
        %v842 = vsel %vm841, %v838, %v840
        %v843 = vsel %vm841, %v836, %v838
        %v844 = vsel %vm841, %v834, %v836
        %v845 = vsel %vm841, %v840, %v834
        %s846 = scalar_lea.vmem %s1, 28
        %v847 = vld [vmem:[%s846] sm:$0xf]
        %v849 = vlaneseq
        %v850 = vshrl.u32 %v849, 7
        %v851 = vsub.s32 0, %v850
        %v852 = vrot.slane %v847, %v851
        %v853 = vlaneseq
        %v854 = vshrl.u32 %v853, 7
        %v855 = vsub.s32 1, %v854
        %v856 = vrot.slane %v847, %v855
        %v857 = vlaneseq
        %v858 = vshrl.u32 %v857, 7
        %v859 = vsub.s32 2, %v858
        %v860 = vrot.slane %v847, %v859
        %v861 = vlaneseq
        %v862 = vshrl.u32 %v861, 7
        %v863 = vsub.s32 3, %v862
        %v864 = vrot.slane %v847, %v863
        %v869 = vmul.f32 %v844, %v852
        %v870 = vmul.f32 %v843, %v856
        %v871 = vmul.f32 %v842, %v860
        %v872 = vmul.f32 %v845, %v864
        %v877 = vrot.slane %v869, 4
        %v878 = vrot.slane %v870, 4
        %v879 = vrot.slane %v871, 4
        %v880 = vrot.slane %v872, 4
        %885 = vst [vmem:[#allocation2 + $0x60] sm:$0xf0] %v877
        %886 = vst [vmem:[#allocation2 + $0x68] sm:$0xf0] %v878
        %887 = vst [vmem:[#allocation2 + $0x70] sm:$0xf0] %v879
        %888 = vst [vmem:[#allocation2 + $0x78] sm:$0xf0] %v880
        %889 = vrot.lane.b32.xlu0 %v497, 111
        %v890 = vpop.permute.xlu0 %889
        %891 = vrot.lane.b32.xlu0 %v498, 111
        %v892 = vpop.permute.xlu0 %891
        %893 = vrot.lane.b32.xlu0 %v499, 111
        %v894 = vpop.permute.xlu0 %893
        %895 = vrot.lane.b32.xlu0 %v500, 111
        %v896 = vpop.permute.xlu0 %895
        %vm897 = vcmp.lt.s32.totalorder %v510, 111
        %v898 = vsel %vm897, %v894, %v896
        %v899 = vsel %vm897, %v892, %v894
        %v900 = vsel %vm897, %v890, %v892
        %v901 = vsel %vm897, %v896, %v890
        %s902 = scalar_lea.vmem %s1, 32
        %v903 = vld [vmem:[%s902] sm:$0xf]
        %v905 = vlaneseq
        %v906 = vshrl.u32 %v905, 7
        %v907 = vsub.s32 0, %v906
        %v908 = vrot.slane %v903, %v907
        %v909 = vlaneseq
        %v910 = vshrl.u32 %v909, 7
        %v911 = vsub.s32 1, %v910
        %v912 = vrot.slane %v903, %v911
        %v913 = vlaneseq
        %v914 = vshrl.u32 %v913, 7
        %v915 = vsub.s32 2, %v914
        %v916 = vrot.slane %v903, %v915
        %v917 = vlaneseq
        %v918 = vshrl.u32 %v917, 7
        %v919 = vsub.s32 3, %v918
        %v920 = vrot.slane %v903, %v919
        %v925 = vmul.f32 %v900, %v908
        %v926 = vmul.f32 %v899, %v912
        %v927 = vmul.f32 %v898, %v916
        %v928 = vmul.f32 %v901, %v920
        %929 = vst [vmem:[#allocation2 + $0x80] sm:$0xf] %v925
        %930 = vst [vmem:[#allocation2 + $0x88] sm:$0xf] %v926
        %931 = vst [vmem:[#allocation2 + $0x90] sm:$0xf] %v927
        %932 = vst [vmem:[#allocation2 + $0x98] sm:$0xf] %v928
        %v933 = vld [vmem:[%s4] sm:$0xf]
        %v934 = vld [vmem:[#allocation2] sm:$0xff]
        %v935 = vld [vmem:[#allocation2 + $0x8] sm:$0xff]
        %v936 = vld [vmem:[#allocation2 + $0x10] sm:$0xff]
        %v937 = vld [vmem:[#allocation2 + $0x18] sm:$0xff]
        %v938 = vld [vmem:[#allocation2 + $0x20] sm:$0xff]
        %v939 = vld [vmem:[#allocation2 + $0x28] sm:$0xff]
        %v940 = vld [vmem:[#allocation2 + $0x30] sm:$0xff]
        %v941 = vld [vmem:[#allocation2 + $0x38] sm:$0xff]
        %v942 = vld [vmem:[#allocation2 + $0x40] sm:$0xff]
        %v943 = vld [vmem:[#allocation2 + $0x48] sm:$0xff]
        %v944 = vld [vmem:[#allocation2 + $0x50] sm:$0xff]
        %v945 = vld [vmem:[#allocation2 + $0x58] sm:$0xff]
        %v946 = vld [vmem:[#allocation2 + $0x60] sm:$0xff]
        %v947 = vld [vmem:[#allocation2 + $0x68] sm:$0xff]
        %v948 = vld [vmem:[#allocation2 + $0x70] sm:$0xff]
        %v949 = vld [vmem:[#allocation2 + $0x78] sm:$0xff]
        %v950 = vld [vmem:[#allocation2 + $0x80] sm:$0xf]
        %v951 = vld [vmem:[#allocation2 + $0x88] sm:$0xf]
        %v952 = vld [vmem:[#allocation2 + $0x90] sm:$0xf]
        %v953 = vld [vmem:[#allocation2 + $0x98] sm:$0xf]
        %v954 = vld [vmem:[%s5] sm:$0xf]
        %956 = vset.pattern.permute.xlu0 0
        %957 = vperm.xlu0 %956, %v954
        %v958 = vpop.permute.xlu0 %957
        %vm960 = vcmask 293888
        %v962 = vsel %vm960, %v933, 0
        %vm964 = vcmask 1043456
        %v966 = vsel %vm964, %v950, 0
        %v969 = vsel %vm964, %v951, 0
        %v972 = vsel %vm964, %v952, 0
        %v975 = vsel %vm964, %v953, 0
        %977 = vmatprep.subr.mxu0 %v935
        %978 = vmatpush1.msra.mxu0 %v934
        %979 = vmatprep.subr.mxu0 %v939
        %980 = vmatpush1.msra.mxu0 %v938
        %981 = vmatprep.subr.mxu0 %v943
        %982 = vmatpush1.msra.mxu0 %v942
        %983 = vmatprep.subr.mxu0 %v947
        %984 = vmatpush1.msra.mxu0 %v946
        %985 = vmatprep.subr.mxu0 %v969
        %986 = vmatpush1.msra.mxu0 %v966
        %987 = vmatprep.subr.mxu0 0.0
        %988 = vmatpush1.msra.mxu0 0.0
        %989 = vmatprep.subr.mxu0 0.0
        %990 = vmatpush1.msra.mxu0 0.0
        %991 = vmatprep.subr.mxu0 0.0
        %992 = vmatpush1.msra.mxu0 0.0
        %993 = vmatprep.subr.mxu0 0.0
        %994 = vmatpush1.msra.mxu0 0.0
        %995 = vmatprep.subr.mxu0 0.0
        %996 = vmatpush1.msra.mxu0 0.0
        %997 = vmatprep.subr.mxu0 0.0
        %998 = vmatpush1.msra.mxu0 0.0
        %999 = vmatprep.subr.mxu0 0.0
        %1000 = vmatpush1.msra.mxu0 0.0
        %1001 = vmatprep.subr.mxu0 0.0
        %1002 = vmatpush1.msra.mxu0 0.0
        %1003 = vmatprep.subr.mxu0 0.0
        %1004 = vmatpush1.msra.mxu0 0.0
        %1005 = vmatprep.subr.mxu0 0.0
        %1006 = vmatpush1.msra.mxu0 0.0
        %1007 = vmatprep.subr.mxu0 0.0
        %1008 = vmatpush1.msra.mxu0 0.0
        %1009 = vmatprep.subr.mxu0 0.0
        %1010 = vmatpush1.msra.mxu0 0.0
        %1011 = vmatprep.subr.mxu0 0.0
        %1012 = vmatpush1.msra.mxu0 0.0
        %1013 = vmatprep.subr.mxu0 0.0
        %1014 = vmatpush1.msra.mxu0 0.0
        %1015 = vmatprep.subr.mxu0 0.0
        %1016 = vmatpush1.msra.mxu0 0.0
        %1017 = vmatprep.subr.mxu0 0.0
        %1018 = vmatpush1.msra.mxu0 0.0
        %1019 = vmatprep.subr.mxu0 0.0
        %1020 = vmatpush1.msra.mxu0 0.0
        %1021 = vmatprep.subr.mxu0 0.0
        %1022 = vmatpush1.msra.mxu0 0.0
        %1023 = vmatprep.subr.mxu0 0.0
        %1024 = vmatpush1.msra.mxu0 0.0
        %1025 = vmatprep.subr.mxu0 0.0
        %1026 = vmatpush1.msra.mxu0 0.0
        %1027 = vmatprep.subr.mxu0 0.0
        %1028 = vmatpush1.msra.mxu0 0.0
        %1029 = vmatprep.subr.mxu0 0.0
        %1030 = vmatpush1.msra.mxu0 0.0
        %1031 = vmatprep.subr.mxu0 0.0
        %1032 = vmatpush1.msra.mxu0 0.0
        %1033 = vmatprep.subr.mxu0 0.0
        %1034 = vmatpush1.msra.mxu0 0.0
        %1035 = vmatprep.subr.mxu0 0.0
        %1036 = vmatpush1.msra.mxu0 0.0
        %1037 = vmatprep.subr.mxu0 0.0
        %1038 = vmatpush1.msra.mxu0 0.0
        %1039 = vmatprep.subr.mxu0 0.0
        %1040 = vmatpush1.msra.mxu0 0.0
        %1041 = vmatprep.mubr.f32.mxu0 0.0
        %1042 = vmatmul.mubr.f32.gmra.mrb[0].mxu0 %v962
        %v1043 = vpop.f32.mrb[0].mxu0
        %v1044 = vadd.f32 %v958, %v1043
        %v1045 = vpop.f32.mrb[0].mxu0
        %v1046 = vadd.f32 %v958, %v1045
        %1047 = vdwg.mxu0
        %1048 = vmatprep.subr.mxu0 %v937
        %1049 = vmatpush1.msra.mxu0 %v936
        %1050 = vmatprep.subr.mxu0 %v941
        %1051 = vmatpush1.msra.mxu0 %v940
        %1052 = vmatprep.subr.mxu0 %v945
        %1053 = vmatpush1.msra.mxu0 %v944
        %1054 = vmatprep.subr.mxu0 %v949
        %1055 = vmatpush1.msra.mxu0 %v948
        %1056 = vmatprep.subr.mxu0 %v975
        %1057 = vmatpush1.msra.mxu0 %v972
        %1058 = vmatprep.subr.mxu0 0.0
        %1059 = vmatpush1.msra.mxu0 0.0
        %1060 = vmatprep.subr.mxu0 0.0
        %1061 = vmatpush1.msra.mxu0 0.0
        %1062 = vmatprep.subr.mxu0 0.0
        %1063 = vmatpush1.msra.mxu0 0.0
        %1064 = vmatprep.subr.mxu0 0.0
        %1065 = vmatpush1.msra.mxu0 0.0
        %1066 = vmatprep.subr.mxu0 0.0
        %1067 = vmatpush1.msra.mxu0 0.0
        %1068 = vmatprep.subr.mxu0 0.0
        %1069 = vmatpush1.msra.mxu0 0.0
        %1070 = vmatprep.subr.mxu0 0.0
        %1071 = vmatpush1.msra.mxu0 0.0
        %1072 = vmatprep.subr.mxu0 0.0
        %1073 = vmatpush1.msra.mxu0 0.0
        %1074 = vmatprep.subr.mxu0 0.0
        %1075 = vmatpush1.msra.mxu0 0.0
        %1076 = vmatprep.subr.mxu0 0.0
        %1077 = vmatpush1.msra.mxu0 0.0
        %1078 = vmatprep.subr.mxu0 0.0
        %1079 = vmatpush1.msra.mxu0 0.0
        %1080 = vmatprep.subr.mxu0 0.0
        %1081 = vmatpush1.msra.mxu0 0.0
        %1082 = vmatprep.subr.mxu0 0.0
        %1083 = vmatpush1.msra.mxu0 0.0
        %1084 = vmatprep.subr.mxu0 0.0
        %1085 = vmatpush1.msra.mxu0 0.0
        %1086 = vmatprep.subr.mxu0 0.0
        %1087 = vmatpush1.msra.mxu0 0.0
        %1088 = vmatprep.subr.mxu0 0.0
        %1089 = vmatpush1.msra.mxu0 0.0
        %1090 = vmatprep.subr.mxu0 0.0
        %1091 = vmatpush1.msra.mxu0 0.0
        %1092 = vmatprep.subr.mxu0 0.0
        %1093 = vmatpush1.msra.mxu0 0.0
        %1094 = vmatprep.subr.mxu0 0.0
        %1095 = vmatpush1.msra.mxu0 0.0
        %1096 = vmatprep.subr.mxu0 0.0
        %1097 = vmatpush1.msra.mxu0 0.0
        %1098 = vmatprep.subr.mxu0 0.0
        %1099 = vmatpush1.msra.mxu0 0.0
        %1100 = vmatprep.subr.mxu0 0.0
        %1101 = vmatpush1.msra.mxu0 0.0
        %1102 = vmatprep.subr.mxu0 0.0
        %1103 = vmatpush1.msra.mxu0 0.0
        %1104 = vmatprep.subr.mxu0 0.0
        %1105 = vmatpush1.msra.mxu0 0.0
        %1106 = vmatprep.subr.mxu0 0.0
        %1107 = vmatpush1.msra.mxu0 0.0
        %1108 = vmatprep.subr.mxu0 0.0
        %1109 = vmatpush1.msra.mxu0 0.0
        %1110 = vmatprep.subr.mxu0 0.0
        %1111 = vmatpush1.msra.mxu0 0.0
        %1112 = vmatprep.mubr.f32.mxu0 0.0
        %1113 = vmatmul.mubr.f32.gmra.mrb[0].mxu0 %v962
        %v1114 = vpop.f32.mrb[0].mxu0
        %v1115 = vadd.f32 %v958, %v1114
        %v1116 = vpop.f32.mrb[0].mxu0
        %v1117 = vadd.f32 %v958, %v1116
        %1118 = vdwg.mxu0
        %v1119 = vmax.f32 %v1044, 0.0
        %v1120 = vmax.f32 %v1046, 0.0
        %v1121 = vmax.f32 %v1115, 0.0
        %v1122 = vmax.f32 %v1117, 0.0
        %v1123 = vld [vmem:[%s6] sm:$0xff]
        %v1124 = vld [vmem:[%s6 + $0x8] sm:$0xff]
        %v1125 = vld [vmem:[%s7] sm:$0xff]
        %v1126 = vld [vmem:[%s7 + $0x8] sm:$0xff]
        %1128 = vset.pattern.permute.xlu0 0
        %1129 = vperm.xlu0 %1128, %v1125
        %v1130 = vpop.permute.xlu0 %1129
        %1133 = vset.pattern.permute.xlu0 0
        %1134 = vperm.xlu0 %1133, %v1126
        %v1135 = vpop.permute.xlu0 %1134
        %vm1137 = vcmask 31744
        %v1139 = vsel %vm1137, %v1123, 0
        %v1142 = vsel %vm1137, %v1124, 0
        %v1145 = vsel %vm964, %v1119, 0
        %v1148 = vsel %vm964, %v1120, 0
        %v1151 = vsel %vm964, %v1121, 0
        %v1154 = vsel %vm964, %v1122, 0
        %1156 = vmatprep.subr.mxu0 %v1148
        %1157 = vmatpush1.msra.mxu0 %v1145
        %1158 = vmatprep.subr.mxu0 0.0
        %1159 = vmatpush1.msra.mxu0 0.0
        %1160 = vmatprep.subr.mxu0 0.0
        %1161 = vmatpush1.msra.mxu0 0.0
        %1162 = vmatprep.subr.mxu0 0.0
        %1163 = vmatpush1.msra.mxu0 0.0
        %1164 = vmatprep.subr.mxu0 0.0
        %1165 = vmatpush1.msra.mxu0 0.0
        %1166 = vmatprep.subr.mxu0 0.0
        %1167 = vmatpush1.msra.mxu0 0.0
        %1168 = vmatprep.subr.mxu0 0.0
        %1169 = vmatpush1.msra.mxu0 0.0
        %1170 = vmatprep.subr.mxu0 0.0
        %1171 = vmatpush1.msra.mxu0 0.0
        %1172 = vmatprep.subr.mxu0 0.0
        %1173 = vmatpush1.msra.mxu0 0.0
        %1174 = vmatprep.subr.mxu0 0.0
        %1175 = vmatpush1.msra.mxu0 0.0
        %1176 = vmatprep.subr.mxu0 0.0
        %1177 = vmatpush1.msra.mxu0 0.0
        %1178 = vmatprep.subr.mxu0 0.0
        %1179 = vmatpush1.msra.mxu0 0.0
        %1180 = vmatprep.subr.mxu0 0.0
        %1181 = vmatpush1.msra.mxu0 0.0
        %1182 = vmatprep.subr.mxu0 0.0
        %1183 = vmatpush1.msra.mxu0 0.0
        %1184 = vmatprep.subr.mxu0 0.0
        %1185 = vmatpush1.msra.mxu0 0.0
        %1186 = vmatprep.subr.mxu0 0.0
        %1187 = vmatpush1.msra.mxu0 0.0
        %1188 = vmatprep.subr.mxu0 0.0
        %1189 = vmatpush1.msra.mxu0 0.0
        %1190 = vmatprep.subr.mxu0 0.0
        %1191 = vmatpush1.msra.mxu0 0.0
        %1192 = vmatprep.subr.mxu0 0.0
        %1193 = vmatpush1.msra.mxu0 0.0
        %1194 = vmatprep.subr.mxu0 0.0
        %1195 = vmatpush1.msra.mxu0 0.0
        %1196 = vmatprep.subr.mxu0 0.0
        %1197 = vmatpush1.msra.mxu0 0.0
        %1198 = vmatprep.subr.mxu0 0.0
        %1199 = vmatpush1.msra.mxu0 0.0
        %1200 = vmatprep.subr.mxu0 0.0
        %1201 = vmatpush1.msra.mxu0 0.0
        %1202 = vmatprep.subr.mxu0 0.0
        %1203 = vmatpush1.msra.mxu0 0.0
        %1204 = vmatprep.subr.mxu0 0.0
        %1205 = vmatpush1.msra.mxu0 0.0
        %1206 = vmatprep.subr.mxu0 0.0
        %1207 = vmatpush1.msra.mxu0 0.0
        %1208 = vmatprep.subr.mxu0 0.0
        %1209 = vmatpush1.msra.mxu0 0.0
        %1210 = vmatprep.subr.mxu0 0.0
        %1211 = vmatpush1.msra.mxu0 0.0
        %1212 = vmatprep.subr.mxu0 0.0
        %1213 = vmatpush1.msra.mxu0 0.0
        %1214 = vmatprep.subr.mxu0 0.0
        %1215 = vmatpush1.msra.mxu0 0.0
        %1216 = vmatprep.subr.mxu0 0.0
        %1217 = vmatpush1.msra.mxu0 0.0
        %1218 = vmatprep.subr.mxu0 0.0
        %1219 = vmatpush1.msra.mxu0 0.0
        %1220 = vmatprep.mubr.f32.mxu0 0.0
        %1221 = vmatmul.mubr.f32.gmra.mrb[0].mxu0 %v1139
        %v1222 = vpop.f32.mrb[0].mxu0
        %v1223 = vadd.f32 %v1130, %v1222
        %v1224 = vpop.f32.mrb[0].mxu0
        %v1225 = vadd.f32 %v1130, %v1224
        %1226 = vmatprep.mubr.f32.mxu0 0.0
        %1227 = vmatmul.mubr.f32.gmra.mrb[0].mxu0 %v1142
        %v1228 = vpop.f32.mrb[0].mxu0
        %v1229 = vadd.f32 %v1135, %v1228
        %v1230 = vpop.f32.mrb[0].mxu0
        %v1231 = vadd.f32 %v1135, %v1230
        %1232 = vdwg.mxu0
        %1233 = vmatprep.subr.mxu0 %v1154
        %1234 = vmatpush1.msra.mxu0 %v1151
        %1235 = vmatprep.subr.mxu0 0.0
        %1236 = vmatpush1.msra.mxu0 0.0
        %1237 = vmatprep.subr.mxu0 0.0
        %1238 = vmatpush1.msra.mxu0 0.0
        %1239 = vmatprep.subr.mxu0 0.0
        %1240 = vmatpush1.msra.mxu0 0.0
        %1241 = vmatprep.subr.mxu0 0.0
        %1242 = vmatpush1.msra.mxu0 0.0
        %1243 = vmatprep.subr.mxu0 0.0
        %1244 = vmatpush1.msra.mxu0 0.0
        %1245 = vmatprep.subr.mxu0 0.0
        %1246 = vmatpush1.msra.mxu0 0.0
        %1247 = vmatprep.subr.mxu0 0.0
        %1248 = vmatpush1.msra.mxu0 0.0
        %1249 = vmatprep.subr.mxu0 0.0
        %1250 = vmatpush1.msra.mxu0 0.0
        %1251 = vmatprep.subr.mxu0 0.0
        %1252 = vmatpush1.msra.mxu0 0.0
        %1253 = vmatprep.subr.mxu0 0.0
        %1254 = vmatpush1.msra.mxu0 0.0
        %1255 = vmatprep.subr.mxu0 0.0
        %1256 = vmatpush1.msra.mxu0 0.0
        %1257 = vmatprep.subr.mxu0 0.0
        %1258 = vmatpush1.msra.mxu0 0.0
        %1259 = vmatprep.subr.mxu0 0.0
        %1260 = vmatpush1.msra.mxu0 0.0
        %1261 = vmatprep.subr.mxu0 0.0
        %1262 = vmatpush1.msra.mxu0 0.0
        %1263 = vmatprep.subr.mxu0 0.0
        %1264 = vmatpush1.msra.mxu0 0.0
        %1265 = vmatprep.subr.mxu0 0.0
        %1266 = vmatpush1.msra.mxu0 0.0
        %1267 = vmatprep.subr.mxu0 0.0
        %1268 = vmatpush1.msra.mxu0 0.0
        %1269 = vmatprep.subr.mxu0 0.0
        %1270 = vmatpush1.msra.mxu0 0.0
        %1271 = vmatprep.subr.mxu0 0.0
        %1272 = vmatpush1.msra.mxu0 0.0
        %1273 = vmatprep.subr.mxu0 0.0
        %1274 = vmatpush1.msra.mxu0 0.0
        %1275 = vmatprep.subr.mxu0 0.0
        %1276 = vmatpush1.msra.mxu0 0.0
        %1277 = vmatprep.subr.mxu0 0.0
        %1278 = vmatpush1.msra.mxu0 0.0
        %1279 = vmatprep.subr.mxu0 0.0
        %1280 = vmatpush1.msra.mxu0 0.0
        %1281 = vmatprep.subr.mxu0 0.0
        %1282 = vmatpush1.msra.mxu0 0.0
        %1283 = vmatprep.subr.mxu0 0.0
        %1284 = vmatpush1.msra.mxu0 0.0
        %1285 = vmatprep.subr.mxu0 0.0
        %1286 = vmatpush1.msra.mxu0 0.0
        %1287 = vmatprep.subr.mxu0 0.0
        %1288 = vmatpush1.msra.mxu0 0.0
        %1289 = vmatprep.subr.mxu0 0.0
        %1290 = vmatpush1.msra.mxu0 0.0
        %1291 = vmatprep.subr.mxu0 0.0
        %1292 = vmatpush1.msra.mxu0 0.0
        %1293 = vmatprep.subr.mxu0 0.0
        %1294 = vmatpush1.msra.mxu0 0.0
        %1295 = vmatprep.subr.mxu0 0.0
        %1296 = vmatpush1.msra.mxu0 0.0
        %1297 = vmatprep.mubr.f32.mxu0 0.0
        %1298 = vmatmul.mubr.f32.gmra.mrb[0].mxu0 %v1139
        %v1299 = vpop.f32.mrb[0].mxu0
        %v1300 = vadd.f32 %v1130, %v1299
        %v1301 = vpop.f32.mrb[0].mxu0
        %v1302 = vadd.f32 %v1130, %v1301
        %1303 = vmatprep.mubr.f32.mxu0 0.0
        %1304 = vmatmul.mubr.f32.gmra.mrb[0].mxu0 %v1142
        %v1305 = vpop.f32.mrb[0].mxu0
        %v1306 = vadd.f32 %v1135, %v1305
        %v1307 = vpop.f32.mrb[0].mxu0
        %v1308 = vadd.f32 %v1135, %v1307
        %1309 = vdwg.mxu0
        %v1310 = vld [vmem:[%s304] sm:$0xff]
        %v1311 = vld [vmem:[%s304 + $0x8] sm:$0xff]
        %v1312 = vld [vmem:[%s304 + $0x10] sm:$0xff]
        %v1313 = vld [vmem:[%s304 + $0x18] sm:$0xff]
        %v1314 = vld [vmem:[%s304 + $0x20] sm:$0xff]
        %v1315 = vld [vmem:[%s304 + $0x28] sm:$0xff]
        %v1316 = vld [vmem:[%s304 + $0x30] sm:$0xff]
        %v1317 = vld [vmem:[%s304 + $0x38] sm:$0xff]
        %v1318 = vadd.f32 %v1223, %v1310
        %v1319 = vadd.f32 %v1225, %v1311
        %v1320 = vadd.f32 %v1300, %v1312
        %v1321 = vadd.f32 %v1302, %v1313
        %v1322 = vadd.f32 %v1229, %v1314
        %v1323 = vadd.f32 %v1231, %v1315
        %v1324 = vadd.f32 %v1306, %v1316
        %v1325 = vadd.f32 %v1308, %v1317
        %v1326 = vmax.f32 %v1318, 0.0
        %v1327 = vmax.f32 %v1319, 0.0
        %v1328 = vmax.f32 %v1320, 0.0
        %v1329 = vmax.f32 %v1321, 0.0
        %v1330 = vmax.f32 %v1322, 0.0
        %v1331 = vmax.f32 %v1323, 0.0
        %v1332 = vmax.f32 %v1324, 0.0
        %v1333 = vmax.f32 %v1325, 0.0
        %1334 = vst [vmem:[%s333] sm:$0xff] %v1326
        %1335 = vst [vmem:[%s333 + $0x8] sm:$0xff] %v1327
        %1336 = vst [vmem:[%s333 + $0x10] sm:$0xff] %v1328
        %1337 = vst [vmem:[%s333 + $0x18] sm:$0xff] %v1329
        %1338 = vst [vmem:[%s333 + $0x20] sm:$0xff] %v1330
        %1339 = vst [vmem:[%s333 + $0x28] sm:$0xff] %v1331
        %1340 = vst [vmem:[%s333 + $0x30] sm:$0xff] %v1332
        %1341 = vst [vmem:[%s333 + $0x38] sm:$0xff] %v1333
        %s1342 = sand.u32 %s200, 1
        %s1343 = sand.u32 %s200, 1
        %s1344 = smul.addr %s1343, 64
        %s1345 = scalar_lea.vmem [#allocation4], %s1344
        // Predicated region
        $region76: #{bottleneck_forward.1} parent=70 // pred_check
          %p1346 = pneg %p210
        $region77: #{bottleneck_forward.1} parent=70 // pred_check_branch
          %1348 = sbr.rel (%p1346) target = $region79
        $region78: #{bottleneck_forward.1} parent=70 // pred_region
          %s1349 = smul.u32 4, %s19
          %s1350 = smul.addr %s1349, 8
          %s1351 = scalar_lea.vmem %s8, %s1350
          // Predicated region
          $region80: #{bottleneck_forward.1} parent=78 // pred_check
            _
          $region81: #{bottleneck_forward.1} parent=78 // pred_check_branch
            %1353 = sbr.rel (0) target = $region83
          $region82: #{bottleneck_forward.1} parent=78 // pred_region
            // Predicated region
            $region84: #{bottleneck_forward.1} parent=82 // pred_check
              _
            $region85: #{bottleneck_forward.1} parent=82 // pred_check_branch
              %1355 = sbr.rel (0) target = $region87
            $region86: #{bottleneck_forward.1} parent=82 // pred_region
              loop: start=0, step=1, limit=1
              $region88: #{bottleneck_forward.1} parent=86 // loop_pre_header
                _
              $region89: #{bottleneck_forward.1} parent=86 // loop_header
                %s1357 = sphi 0, %s1361
                %p1358 = scmp.ge.s32.totalorder %s1357, 1
                %s1362 = sphi %s1345, %s1345
                %s1363 = sphi %s1351, %s1351
              $region90: #{bottleneck_forward.1} parent=86 // loop_header_branch
                %1360 = sbr.rel (%p1358) target = $region94
              $region91: #{bottleneck_forward.1} parent=86 // loop_body
                %v1364 = vld [vmem:[%s1362] sm:$0xff]
                %1365 = vst [vmem:[%s1363] sm:$0xff] %v1364
                %v1366 = vld [vmem:[%s1362 + $0x8] sm:$0xff]
                %1367 = vst [vmem:[%s1363 + $0x8] sm:$0xff] %v1366
                %v1368 = vld [vmem:[%s1362 + $0x10] sm:$0xff]
                %1369 = vst [vmem:[%s1363 + $0x10] sm:$0xff] %v1368
                %v1370 = vld [vmem:[%s1362 + $0x18] sm:$0xff]
                %1371 = vst [vmem:[%s1363 + $0x18] sm:$0xff] %v1370
                %v1372 = vld [vmem:[%s1362 + $0x20] sm:$0xff]
                %1373 = vst [vmem:[%s1363 + $0x40] sm:$0xff] %v1372
                %v1374 = vld [vmem:[%s1362 + $0x28] sm:$0xff]
                %1375 = vst [vmem:[%s1363 + $0x48] sm:$0xff] %v1374
                %v1376 = vld [vmem:[%s1362 + $0x30] sm:$0xff]
                %1377 = vst [vmem:[%s1363 + $0x50] sm:$0xff] %v1376
                %v1378 = vld [vmem:[%s1362 + $0x38] sm:$0xff]
                %1379 = vst [vmem:[%s1363 + $0x58] sm:$0xff] %v1378
              $region92: #{bottleneck_forward.1} parent=86 // loop_footer
                %s1361 = sadd.s32 1, %s1357
              $region93: #{bottleneck_forward.1} parent=86 // loop_footer_branch
                %1356 = sbr.rel target = $region89
              $region94: #{bottleneck_forward.1} parent=86 // loop_exit
                _
            $region87: #{bottleneck_forward.1} parent=82 // pred_fallthru
              _
            // Predicated region
            $region95: #{bottleneck_forward.1} parent=82 // pred_check
              _
            $region96: #{bottleneck_forward.1} parent=82 // pred_check_branch
              %1381 = sbr.rel target = $region98
            $region97: #{bottleneck_forward.1} parent=82 // pred_region
              _
            $region98: #{bottleneck_forward.1} parent=82 // pred_fallthru
              _
          $region83: #{bottleneck_forward.1} parent=78 // pred_fallthru
            _
          %1382 = vnop
        $region79: #{bottleneck_forward.1} parent=70 // pred_fallthru
          _
      $region71: #{bottleneck_forward.1} parent=5 // pred_fallthru
        _
      %p1383 = scmp.le.s32.totalorder 2, %s14
      // Predicated region
      $region99: #{bottleneck_forward.1} parent=5 // pred_check
        %p1384 = pneg %p1383
      $region100: #{bottleneck_forward.1} parent=5 // pred_check_branch
        %1386 = sbr.rel (%p1384) target = $region102
      $region101: #{bottleneck_forward.1} parent=5 // pred_region
        %s1387 = ssub.s32 %s14, 2
        // Predicated region
        $region103: #{bottleneck_forward.1} parent=101 // pred_check
          %p1388 = pneg %p216
        $region104: #{bottleneck_forward.1} parent=101 // pred_check_branch
          %1390 = sbr.rel (%p1388) target = $region106
        $region105: #{bottleneck_forward.1} parent=101 // pred_region
          %s1391 = sand.u32 %s201, 1
          %s1392 = sand.u32 %s201, 1
          %s1393 = smul.addr %s1392, 64
          %s1394 = scalar_lea.vmem [#allocation4], %s1393
        $region106: #{bottleneck_forward.1} parent=101 // pred_fallthru
          _
      $region102: #{bottleneck_forward.1} parent=5 // pred_fallthru
        _
    $region6: #{bottleneck_forward.1} parent=1 // loop_footer
      %s18 = sadd.s32 1, %s14
    $region7: #{bottleneck_forward.1} parent=1 // loop_footer_branch
      %13 = sbr.rel target = $region3
    $region8: #{bottleneck_forward.1} parent=1 // loop_exit
      _

</llo_original>
